<compile_context>
chip_gen: v7x
topology: tpu7x:2x2x1
jax: 0.10.0
libtpu: 0.0.40
codegen_flags: <defaults>
</compile_context>

<pallas_src>
import functools

import jax
import jax.numpy as jnp
import numpy as np
from jax.experimental import pallas as pl
from jax.experimental.pallas import tpu as pltpu


# ----------------------------------------------------------------------------- #
# Pallas kernel: whole MPNN forward for Bt graphs per grid step.
# ----------------------------------------------------------------------------- #
def _mpnn_kernel(nf_ref, adj_ref, invn_ref, nsc_ref,
                 w_init_ref, w_e0_ref, w_er_ref, w_ef_top_ref, w_ef_bot_ref,
                 w_msg_a_ref, w_msg_b_ref, w_upd_a_ref, w_upd_b_ref,
                 w_pool_ref, w_ro_pool_ref, w_ro_local_ref, b_ro_ref,
                 out_ref, *, bt, n_nodes, n_layers, binary_adj, mxu_dtype):
    f32 = jnp.float32
    N = n_nodes
    rows = bt * N

    nf2 = nf_ref[0].reshape(rows, -1)                  # (Bt*N, P)  (mxu dtype)
    inv_norm = invn_ref[0]                             # (Bt, N, 1) f32
    norm_sc2 = nsc_ref[0].reshape(rows, 1)             # (Bt*N, 1)  f32
    adj_mx = adj_ref[0].astype(mxu_dtype)              # (Bt, N, N) for the MXU

    def mm(x, w):                                      # MXU matmul, f32 accumulate
        return jnp.dot(x, w, preferred_element_type=f32)

    # ---- node init embedding: relu(nf @ W_init), all Bt graphs stacked on M --
    cur = jnp.maximum(mm(nf2, w_init_ref[...]), 0.0)   # (Bt*N, F) f32

    # ---- EdgeAndNodeEmbeddingLayer -------------------------------------------
    nf_proj = mm(nf2, w_er_ref[...])                   # (Bt*N, F-1) f32
    if binary_adj:
        # 0/1 adjacency (mask == adj):
        #   sum_j mask_ij * relu(a_ij*w0 + nf_proj_j) == adj @ relu(w0 + nf_proj)
        k = jnp.maximum(nf_proj + w_e0_ref[...], 0.0)  # (Bt*N, F-1)
        k3 = k.reshape(bt, N, -1).astype(mxu_dtype)
        emb = jnp.einsum('bij,bjf->bif', adj_mx, k3,
                         preferred_element_type=f32)   # (Bt, N, F-1)
    else:
        # general weighted adjacency: exact per-edge decomposition (per graph)
        adj_f = adj_ref[0].astype(f32)
        w_e0 = w_e0_ref[...]                           # (1, F-1)
        nfp3 = nf_proj.reshape(bt, N, -1)
        parts = []
        for b in range(bt):
            a = adj_f[b]
            mask = (a != 0.0).astype(f32)
            s = (a[:, :, None] * w_e0[None, :, :]
                 + mask[:, :, None] * nfp3[b][None, :, :])
            parts.append(jnp.sum(jnp.maximum(s, 0.0), axis=1))
        emb = jnp.stack(parts, axis=0)                 # (Bt, N, F-1)

    emb = (emb * inv_norm).reshape(rows, -1)           # (Bt*N, F-1) f32
    edge_emb = jnp.maximum(
        mm(emb.astype(mxu_dtype), w_ef_top_ref[...]) + norm_sc2 * w_ef_bot_ref[...],
        0.0)                                           # (Bt*N, F) f32
    edge_emb_mx = edge_emb.astype(mxu_dtype)

    # ---- UpdateNodeEmbeddingLayer x n_layers ----------------------------------
    for layer in range(n_layers):
        agg = jnp.einsum('bij,bjf->bif', adj_mx,
                         cur.reshape(bt, N, -1).astype(mxu_dtype),
                         preferred_element_type=f32) * inv_norm   # (Bt, N, F)
        agg = agg.reshape(rows, -1)
        msg = jnp.maximum(
            mm(agg.astype(mxu_dtype), w_msg_a_ref[layer])
            + mm(edge_emb_mx, w_msg_b_ref[layer]), 0.0)
        cur = jnp.maximum(
            mm(cur.astype(mxu_dtype), w_upd_a_ref[layer])
            + mm(msg.astype(mxu_dtype), w_upd_b_ref[layer]), 0.0)

    # ---- ReadoutLayer (lane-dense (Bt, N) output) -----------------------------
    cur3 = cur.reshape(bt, N, -1)                               # (Bt, N, F) f32
    pooled = jnp.sum(cur3, axis=1) * (1.0 / N)                  # (Bt, F)
    f_pooled = jnp.maximum(mm(pooled.astype(mxu_dtype), w_pool_ref[...]), 0.0)
    # f_local = relu(cur) == cur (cur is already non-negative) -> relu dropped.
    pool_part = jnp.sum(f_pooled * w_ro_pool_ref[...], axis=-1,
                        keepdims=True)                          # (Bt, 1)
    local_part = jnp.sum(cur3 * w_ro_local_ref[...][None, :, :],
                         axis=-1)                               # (Bt, N)
    out_ref[0] = pool_part + local_part + b_ro_ref[...]


# ----------------------------------------------------------------------------- #
# Parameters (deterministic, synthetic)
# ----------------------------------------------------------------------------- #
def make_params(key, n_obs_in, n_features, n_layers):
    P, F, L = n_obs_in, n_features, n_layers
    ks = jax.random.split(key, 8)
    s = 0.1
    return dict(
        w_init=jax.random.normal(ks[0], (P, F), jnp.float32) * s,
        w_edge_emb=jax.random.normal(ks[1], (P + 1, F - 1), jnp.float32) * s,
        w_edge_feat=jax.random.normal(ks[2], (F, F), jnp.float32) * s,
        w_msg=jax.random.normal(ks[3], (L, 2 * F, F), jnp.float32) * s,
        w_upd=jax.random.normal(ks[4], (L, 2 * F, F), jnp.float32) * s,
        w_pool=jax.random.normal(ks[5], (F, F), jnp.float32) * s,
        w_readout=jax.random.normal(ks[6], (2 * F, 1), jnp.float32) * s,
        b_readout=jax.random.normal(ks[7], (1, 1), jnp.float32) * s,
    )


def _choose_bt(batch, n_nodes, target_rows=256):
    """Graphs per grid step: aim for >=256 rows in the flattened matmuls."""
    bt = max(1, min(batch, -(-target_rows // n_nodes)))
    while batch % bt:
        bt -= 1
    return bt


# ----------------------------------------------------------------------------- #
# Wrapper (glue): obs splitting, normalisation, weight pre-split, pallas_call
# ----------------------------------------------------------------------------- #
@functools.partial(jax.jit, static_argnames=("n_obs_in", "binary_adjacency",
                                             "symmetric_adjacency", "mxu_dtype"))
def mpnn_forward(obs, params, n_obs_in=7, binary_adjacency=True,
                 symmetric_adjacency=True, mxu_dtype=jnp.bfloat16):
    if obs.ndim == 2:
        obs = obs[None]
    P = n_obs_in
    # Only the small node-feature slab needs transposing; the adjacency slab is
    # its own transpose for undirected graphs (symmetric_adjacency=True).
    nf = jnp.swapaxes(obs[:, :P, :], -1, -2)                  # (B, N, P)
    adj_slab = obs[:, P:, :]                                  # (B, N, N)
    adj = adj_slab if symmetric_adjacency else jnp.swapaxes(adj_slab, -1, -2)

    B, N, _ = nf.shape
    F = params["w_pool"].shape[0]
    L = params["w_msg"].shape[0]

    # get_normalisation (batch-global max for norm_sc, matching torch .max())
    norm = jnp.sum((adj != 0).astype(jnp.float32), axis=1)[..., None]   # (B,N,1)
    norm = jnp.where(norm == 0.0, 1.0, norm)
    inv_norm = 1.0 / norm
    norm_sc = norm / jnp.max(norm)

    bt = _choose_bt(B, N)
    G = B // bt
    md = mxu_dtype

    # Batch-blocked inputs (leading grid dim, blocks keep full last-two dims).
    nf_b = nf.astype(md).reshape(G, bt, N, P)
    adj_b = (adj.astype(md) if binary_adjacency else adj).reshape(G, bt, N, N)
    invn_b = inv_norm.reshape(G, bt, N, 1)
    nsc_b = norm_sc.reshape(G, bt, N, 1)

    # Pre-split / pre-cast weights (no unaligned sublane slices in the kernel).
    w_init = params["w_init"].astype(md)
    w_e0 = params["w_edge_emb"][0:1, :]                       # f32, elementwise
    w_e_rest = params["w_edge_emb"][1:, :].astype(md)
    w_ef_top = params["w_edge_feat"][:F - 1, :].astype(md)
    w_ef_bot = params["w_edge_feat"][F - 1:, :]               # f32, elementwise
    w_msg_a = params["w_msg"][:, :F, :].astype(md)
    w_msg_b = params["w_msg"][:, F:, :].astype(md)
    w_upd_a = params["w_upd"][:, :F, :].astype(md)
    w_upd_b = params["w_upd"][:, F:, :].astype(md)
    w_pool = params["w_pool"].astype(md)
    w_ro_pool = params["w_readout"][:F, 0].reshape(1, F)      # f32 row vectors
    w_ro_local = params["w_readout"][F:, 0].reshape(1, F)
    b_ro = params["b_readout"]                                # (1, 1)

    def batched_spec(*tail):
        nd = len(tail)
        return pl.BlockSpec((1,) + tail, lambda g, nd=nd: (g,) + (0,) * nd)

    def weight_spec(shape):
        nd = len(shape)
        return pl.BlockSpec(shape, lambda g, nd=nd: (0,) * nd)

    kernel = functools.partial(_mpnn_kernel, bt=bt, n_nodes=N, n_layers=L,
                               binary_adj=binary_adjacency, mxu_dtype=md)

    out = pl.pallas_call(
        kernel,
        out_shape=jax.ShapeDtypeStruct((G, bt, N), jnp.float32),
        grid=(G,),
        in_specs=[
            batched_spec(bt, N, P),        # node features
            batched_spec(bt, N, N),        # adjacency
            batched_spec(bt, N, 1),        # 1 / norm
            batched_spec(bt, N, 1),        # norm / max(norm)
            weight_spec((P, F)),           # W_init
            weight_spec((1, F - 1)),       # W_e row 0   (adj column)
            weight_spec((P, F - 1)),       # W_e rows 1: (node-feature columns)
            weight_spec((F - 1, F)),       # W_ef top
            weight_spec((1, F)),           # W_ef bottom (norm_sc column)
            weight_spec((L, F, F)),        # W_msg (agg half)
            weight_spec((L, F, F)),        # W_msg (edge half)
            weight_spec((L, F, F)),        # W_upd (cur half)
            weight_spec((L, F, F)),        # W_upd (msg half)
            weight_spec((F, F)),           # W_pool
            weight_spec((1, F)),           # W_readout pooled half (row)
            weight_spec((1, F)),           # W_readout local half (row)
            weight_spec((1, 1)),           # readout bias
        ],
        out_specs=batched_spec(bt, N),
        compiler_params=pltpu.CompilerParams(dimension_semantics=("parallel",)),
    )(nf_b, adj_b, invn_b, nsc_b,
      w_init, w_e0, w_e_rest, w_ef_top, w_ef_bot,
      w_msg_a, w_msg_b, w_upd_a, w_upd_b,
      w_pool, w_ro_pool, w_ro_local, b_ro)

    return jnp.squeeze(out.reshape(B, N))                     # matches torch .squeeze()


# ----------------------------------------------------------------------------- #
# Pure-JAX reference (mirrors the PyTorch forward literally) for validation
# ----------------------------------------------------------------------------- #
def mpnn_reference(obs, params, n_obs_in=7):
    hi = jax.lax.Precision.HIGHEST
    if obs.ndim == 2:
        obs = obs[None]
    obs = jnp.swapaxes(obs, -1, -2)
    nf = obs[:, :, :n_obs_in]
    adj = obs[:, :, n_obs_in:]
    norm = jnp.sum((adj != 0), axis=1)[..., None].astype(jnp.float32)
    norm = jnp.where(norm == 0, 1.0, norm)
    L = params["w_msg"].shape[0]
    B, N, P = nf.shape

    cur = jax.nn.relu(jnp.einsum("bnp,pf->bnf", nf, params["w_init"], precision=hi))
    edge_feats = jnp.concatenate(
        [adj[..., None], jnp.broadcast_to(nf[:, None, :, :], (B, N, N, P))], axis=-1)
    edge_feats = edge_feats * (adj[..., None] != 0).astype(jnp.float32)
    emb = jax.nn.relu(jnp.einsum("bijk,kf->bijf", edge_feats,
                                 params["w_edge_emb"], precision=hi))
    emb_sum = emb.sum(axis=2) / norm
    cat = jnp.concatenate([emb_sum, norm / jnp.max(norm)], axis=-1)
    edge_emb = jax.nn.relu(jnp.einsum("bnf,fg->bng", cat,
                                      params["w_edge_feat"], precision=hi))
    for layer in range(L):
        agg = jnp.einsum("bij,bjf->bif", adj, cur, precision=hi) / norm
        msg = jax.nn.relu(jnp.einsum("bnf,fg->bng",
                                     jnp.concatenate([agg, edge_emb], -1),
                                     params["w_msg"][layer], precision=hi))
        cur = jax.nn.relu(jnp.einsum("bnf,fg->bng",
                                     jnp.concatenate([cur, msg], -1),
                                     params["w_upd"][layer], precision=hi))
    pooled = cur.sum(axis=1) / N
    h_pooled = jnp.einsum("bf,fg->bg", pooled, params["w_pool"], precision=hi)
    f_pooled = jnp.broadcast_to(h_pooled[:, None, :], cur.shape)
    feats = jax.nn.relu(jnp.concatenate([f_pooled, cur], axis=-1))
    out = jnp.einsum("bnf,fo->bno", feats, params["w_readout"],
                     precision=hi) + params["b_readout"]
    return jnp.squeeze(out)


# ----------------------------------------------------------------------------- #
if __name__ == "__main__":
    key = jax.random.PRNGKey(0)
    n_obs_in, n_features, n_layers = 7, 32, 3

    k_par, k_nf, k_adj = jax.random.split(key, 3)
    params = make_params(k_par, n_obs_in, n_features, n_layers)

    def build_obs(k1, k2, B, N):
        # obs = (B, n_obs_in + N, N): node observations + symmetric 0/1 adjacency
        nf_raw = jax.random.normal(k1, (B, n_obs_in, N), jnp.float32)
        a = (jax.random.uniform(k2, (B, N, N)) < 0.35).astype(jnp.float32)
        adj = jnp.triu(a, 1)
        adj = adj + jnp.swapaxes(adj, -1, -2)
        return jnp.concatenate([nf_raw, adj], axis=1)

    # Primary small test: B=2, N=16 -> both graphs fused into one grid step.
    obs = build_obs(k_nf, k_adj, 2, 16)                       # (2, 23, 16)
    out = jax.block_until_ready(mpnn_forward(obs, params, n_obs_in=n_obs_in))
    ref = mpnn_reference(obs, params, n_obs_in=n_obs_in)
    np.testing.assert_allclose(np.asarray(out), np.asarray(ref), rtol=2e-2, atol=2e-2)

    # Multi-block check: B=32 -> 16 graphs per grid step, 2 grid steps.
    k1, k2 = jax.random.split(key)
    obs2 = build_obs(k1, k2, 32, 16)                          # (32, 23, 16)
    out2 = jax.block_until_ready(mpnn_forward(obs2, params, n_obs_in=n_obs_in))
    ref2 = mpnn_reference(obs2, params, n_obs_in=n_obs_in)
    np.testing.assert_allclose(np.asarray(out2), np.asarray(ref2), rtol=2e-2, atol=2e-2)

    print("KERNEL_OK")
</pallas_src>

<mosaic_0001>
module attributes {stable_mosaic.version = 11 : i64} {
  func.func @_mpnn_kernel(%arg0: i32, %arg1: memref<1x2x16x7xbf16, #tpu.memory_space<vmem>>, %arg2: memref<1x2x16x16xbf16, #tpu.memory_space<vmem>>, %arg3: memref<1x2x16x1xf32, #tpu.memory_space<vmem>>, %arg4: memref<1x2x16x1xf32, #tpu.memory_space<vmem>>, %arg5: memref<7x32xbf16, #tpu.memory_space<vmem>>, %arg6: memref<1x31xf32, #tpu.memory_space<vmem>>, %arg7: memref<7x31xbf16, #tpu.memory_space<vmem>>, %arg8: memref<31x32xbf16, #tpu.memory_space<vmem>>, %arg9: memref<1x32xf32, #tpu.memory_space<vmem>>, %arg10: memref<3x32x32xbf16, #tpu.memory_space<vmem>>, %arg11: memref<3x32x32xbf16, #tpu.memory_space<vmem>>, %arg12: memref<3x32x32xbf16, #tpu.memory_space<vmem>>, %arg13: memref<3x32x32xbf16, #tpu.memory_space<vmem>>, %arg14: memref<32x32xbf16, #tpu.memory_space<vmem>>, %arg15: memref<1x32xf32, #tpu.memory_space<vmem>>, %arg16: memref<1x32xf32, #tpu.memory_space<vmem>>, %arg17: memref<1x1xf32, #tpu.memory_space<vmem>>, %arg18: memref<1x2x16xf32, #tpu.memory_space<vmem>>) attributes {dimension_semantics = [#tpu.dimension_semantics<parallel>], iteration_bounds = array<i64: 1>, scalar_prefetch = 0 : i64, scratch_operands = 0 : i64, tpu.core_type = #tpu.core_type<tc>, window_params = [{transform_indices = @transform_0, window_bounds = array<i64: 1, 2, 16, 7>}, {transform_indices = @transform_1, window_bounds = array<i64: 1, 2, 16, 16>}, {transform_indices = @transform_2, window_bounds = array<i64: 1, 2, 16, 1>}, {transform_indices = @transform_3, window_bounds = array<i64: 1, 2, 16, 1>}, {pipeline_mode = #tpu.pipeline_mode<synchronous>, transform_indices = @transform_4, window_bounds = array<i64: 7, 32>}, {pipeline_mode = #tpu.pipeline_mode<synchronous>, transform_indices = @transform_5, window_bounds = array<i64: 1, 31>}, {pipeline_mode = #tpu.pipeline_mode<synchronous>, transform_indices = @transform_6, window_bounds = array<i64: 7, 31>}, {pipeline_mode = #tpu.pipeline_mode<synchronous>, transform_indices = @transform_7, window_bounds = array<i64: 31, 32>}, {pipeline_mode = #tpu.pipeline_mode<synchronous>, transform_indices = @transform_8, window_bounds = array<i64: 1, 32>}, {pipeline_mode = #tpu.pipeline_mode<synchronous>, transform_indices = @transform_9, window_bounds = array<i64: 3, 32, 32>}, {pipeline_mode = #tpu.pipeline_mode<synchronous>, transform_indices = @transform_10, window_bounds = array<i64: 3, 32, 32>}, {pipeline_mode = #tpu.pipeline_mode<synchronous>, transform_indices = @transform_11, window_bounds = array<i64: 3, 32, 32>}, {pipeline_mode = #tpu.pipeline_mode<synchronous>, transform_indices = @transform_12, window_bounds = array<i64: 3, 32, 32>}, {pipeline_mode = #tpu.pipeline_mode<synchronous>, transform_indices = @transform_13, window_bounds = array<i64: 32, 32>}, {pipeline_mode = #tpu.pipeline_mode<synchronous>, transform_indices = @transform_14, window_bounds = array<i64: 1, 32>}, {pipeline_mode = #tpu.pipeline_mode<synchronous>, transform_indices = @transform_15, window_bounds = array<i64: 1, 32>}, {pipeline_mode = #tpu.pipeline_mode<synchronous>, transform_indices = @transform_16, window_bounds = array<i64: 1, 1>}, {transform_indices = @transform_17, window_bounds = array<i64: 1, 2, 16>}]} {
    %c0 = arith.constant 0 : index
    %c0_0 = arith.constant 0 : index
    %c0_1 = arith.constant 0 : index
    %c0_2 = arith.constant 0 : index
    %0 = vector.load %arg1[%c0, %c0_0, %c0_1, %c0_2] : memref<1x2x16x7xbf16, #tpu.memory_space<vmem>>, vector<1x2x16x7xbf16>
    %1 = vector.shape_cast %0 : vector<1x2x16x7xbf16> to vector<2x16x7xbf16>
    %2 = vector.shape_cast %1 : vector<2x16x7xbf16> to vector<32x7xbf16>
    %c0_3 = arith.constant 0 : index
    %c0_4 = arith.constant 0 : index
    %c0_5 = arith.constant 0 : index
    %c0_6 = arith.constant 0 : index
    %3 = vector.load %arg3[%c0_3, %c0_4, %c0_5, %c0_6] : memref<1x2x16x1xf32, #tpu.memory_space<vmem>>, vector<1x2x16x1xf32>
    %4 = vector.shape_cast %3 : vector<1x2x16x1xf32> to vector<2x16x1xf32>
    %c0_7 = arith.constant 0 : index
    %c0_8 = arith.constant 0 : index
    %c0_9 = arith.constant 0 : index
    %c0_10 = arith.constant 0 : index
    %5 = vector.load %arg4[%c0_7, %c0_8, %c0_9, %c0_10] : memref<1x2x16x1xf32, #tpu.memory_space<vmem>>, vector<1x2x16x1xf32>
    %6 = vector.shape_cast %5 : vector<1x2x16x1xf32> to vector<2x16x1xf32>
    %7 = vector.shape_cast %6 : vector<2x16x1xf32> to vector<32x1xf32>
    %c0_11 = arith.constant 0 : index
    %c0_12 = arith.constant 0 : index
    %c0_13 = arith.constant 0 : index
    %c0_14 = arith.constant 0 : index
    %8 = vector.load %arg2[%c0_11, %c0_12, %c0_13, %c0_14] : memref<1x2x16x16xbf16, #tpu.memory_space<vmem>>, vector<1x2x16x16xbf16>
    %9 = vector.shape_cast %8 : vector<1x2x16x16xbf16> to vector<2x16x16xbf16>
    %c0_15 = arith.constant 0 : index
    %c0_16 = arith.constant 0 : index
    %10 = vector.load %arg5[%c0_15, %c0_16] : memref<7x32xbf16, #tpu.memory_space<vmem>>, vector<7x32xbf16>
    %cst = arith.constant dense<0.000000e+00> : vector<32x32xf32>
    %11 = tpu.matmul %2, %10, %cst {dimension_numbers = #tpu.dot_dimension_numbers<[1], [0], [0], [1], [0, 0, 1, 1], [], []>} : vector<32x7xbf16>, vector<7x32xbf16>, vector<32x32xf32> -> vector<32x32xf32>
    %cst_17 = arith.constant 0.000000e+00 : f32
    %12 = vector.broadcast %cst_17 : f32 to vector<32x32xf32>
    %13 = arith.maximumf %11, %12 : vector<32x32xf32>
    %c0_18 = arith.constant 0 : index
    %c0_19 = arith.constant 0 : index
    %14 = vector.load %arg7[%c0_18, %c0_19] : memref<7x31xbf16, #tpu.memory_space<vmem>>, vector<7x31xbf16>
    %cst_20 = arith.constant dense<0.000000e+00> : vector<32x31xf32>
    %15 = tpu.matmul %2, %14, %cst_20 {dimension_numbers = #tpu.dot_dimension_numbers<[1], [0], [0], [1], [0, 0, 1, 1], [], []>} : vector<32x7xbf16>, vector<7x31xbf16>, vector<32x31xf32> -> vector<32x31xf32>
    %c0_21 = arith.constant 0 : index
    %c0_22 = arith.constant 0 : index
    %16 = vector.load %arg6[%c0_21, %c0_22] : memref<1x31xf32, #tpu.memory_space<vmem>>, vector<1x31xf32>
    %17 = vector.broadcast %16 : vector<1x31xf32> to vector<32x31xf32>
    %18 = arith.addf %15, %17 : vector<32x31xf32>
    %cst_23 = arith.constant 0.000000e+00 : f32
    %19 = vector.broadcast %cst_23 : f32 to vector<32x31xf32>
    %20 = arith.maximumf %18, %19 : vector<32x31xf32>
    %21 = vector.shape_cast %20 : vector<32x31xf32> to vector<2x16x31xf32>
    %22 = arith.truncf %21 : vector<2x16x31xf32> to vector<2x16x31xbf16>
    "tpu.trace_start"() <{level = 10 : i32, message = "bij,bjf->bif"}> : () -> ()
    %cst_24 = arith.constant dense<0.000000e+00> : vector<2x16x31xf32>
    %23 = tpu.matmul %9, %22, %cst_24 {dimension_numbers = #tpu.dot_dimension_numbers<[2], [1], [1], [2], [0, 0, 0, 1, 1, 2], [0], [0]>} : vector<2x16x16xbf16>, vector<2x16x31xbf16>, vector<2x16x31xf32> -> vector<2x16x31xf32>
    "tpu.trace_stop"() : () -> ()
    %24 = vector.broadcast %4 : vector<2x16x1xf32> to vector<2x16x31xf32>
    %25 = arith.mulf %23, %24 : vector<2x16x31xf32>
    %26 = vector.shape_cast %25 : vector<2x16x31xf32> to vector<32x31xf32>
    %27 = arith.truncf %26 : vector<32x31xf32> to vector<32x31xbf16>
    %c0_25 = arith.constant 0 : index
    %c0_26 = arith.constant 0 : index
    %28 = vector.load %arg8[%c0_25, %c0_26] : memref<31x32xbf16, #tpu.memory_space<vmem>>, vector<31x32xbf16>
    %cst_27 = arith.constant dense<0.000000e+00> : vector<32x32xf32>
    %29 = tpu.matmul %27, %28, %cst_27 {dimension_numbers = #tpu.dot_dimension_numbers<[1], [0], [0], [1], [0, 0, 1, 1], [], []>} : vector<32x31xbf16>, vector<31x32xbf16>, vector<32x32xf32> -> vector<32x32xf32>
    %c0_28 = arith.constant 0 : index
    %c0_29 = arith.constant 0 : index
    %30 = vector.load %arg9[%c0_28, %c0_29] : memref<1x32xf32, #tpu.memory_space<vmem>>, vector<1x32xf32>
    %31 = vector.broadcast %7 : vector<32x1xf32> to vector<32x32xf32>
    %32 = vector.broadcast %30 : vector<1x32xf32> to vector<32x32xf32>
    %33 = arith.mulf %31, %32 : vector<32x32xf32>
    %34 = arith.addf %29, %33 : vector<32x32xf32>
    %cst_30 = arith.constant 0.000000e+00 : f32
    %35 = vector.broadcast %cst_30 : f32 to vector<32x32xf32>
    %36 = arith.maximumf %34, %35 : vector<32x32xf32>
    %37 = arith.truncf %36 : vector<32x32xf32> to vector<32x32xbf16>
    %38 = vector.shape_cast %13 : vector<32x32xf32> to vector<2x16x32xf32>
    %39 = arith.truncf %38 : vector<2x16x32xf32> to vector<2x16x32xbf16>
    "tpu.trace_start"() <{level = 10 : i32, message = "bij,bjf->bif"}> : () -> ()
    %cst_31 = arith.constant dense<0.000000e+00> : vector<2x16x32xf32>
    %40 = tpu.matmul %9, %39, %cst_31 {dimension_numbers = #tpu.dot_dimension_numbers<[2], [1], [1], [2], [0, 0, 0, 1, 1, 2], [0], [0]>} : vector<2x16x16xbf16>, vector<2x16x32xbf16>, vector<2x16x32xf32> -> vector<2x16x32xf32>
    "tpu.trace_stop"() : () -> ()
    %41 = vector.broadcast %4 : vector<2x16x1xf32> to vector<2x16x32xf32>
    %42 = arith.mulf %40, %41 : vector<2x16x32xf32>
    %43 = vector.shape_cast %42 : vector<2x16x32xf32> to vector<32x32xf32>
    %44 = arith.truncf %43 : vector<32x32xf32> to vector<32x32xbf16>
    %c0_32 = arith.constant 0 : index
    %c0_33 = arith.constant 0 : index
    %c0_34 = arith.constant 0 : index
    %45 = vector.load %arg10[%c0_32, %c0_33, %c0_34] : memref<3x32x32xbf16, #tpu.memory_space<vmem>>, vector<1x32x32xbf16>
    %46 = vector.shape_cast %45 : vector<1x32x32xbf16> to vector<32x32xbf16>
    %cst_35 = arith.constant dense<0.000000e+00> : vector<32x32xf32>
    %47 = tpu.matmul %44, %46, %cst_35 {dimension_numbers = #tpu.dot_dimension_numbers<[1], [0], [0], [1], [0, 0, 1, 1], [], []>} : vector<32x32xbf16>, vector<32x32xbf16>, vector<32x32xf32> -> vector<32x32xf32>
    %c0_36 = arith.constant 0 : index
    %c0_37 = arith.constant 0 : index
    %c0_38 = arith.constant 0 : index
    %48 = vector.load %arg11[%c0_36, %c0_37, %c0_38] : memref<3x32x32xbf16, #tpu.memory_space<vmem>>, vector<1x32x32xbf16>
    %49 = vector.shape_cast %48 : vector<1x32x32xbf16> to vector<32x32xbf16>
    %cst_39 = arith.constant dense<0.000000e+00> : vector<32x32xf32>
    %50 = tpu.matmul %37, %49, %cst_39 {dimension_numbers = #tpu.dot_dimension_numbers<[1], [0], [0], [1], [0, 0, 1, 1], [], []>} : vector<32x32xbf16>, vector<32x32xbf16>, vector<32x32xf32> -> vector<32x32xf32>
    %51 = arith.addf %47, %50 : vector<32x32xf32>
    %cst_40 = arith.constant 0.000000e+00 : f32
    %52 = vector.broadcast %cst_40 : f32 to vector<32x32xf32>
    %53 = arith.maximumf %51, %52 : vector<32x32xf32>
    %54 = arith.truncf %13 : vector<32x32xf32> to vector<32x32xbf16>
    %c0_41 = arith.constant 0 : index
    %c0_42 = arith.constant 0 : index
    %c0_43 = arith.constant 0 : index
    %55 = vector.load %arg12[%c0_41, %c0_42, %c0_43] : memref<3x32x32xbf16, #tpu.memory_space<vmem>>, vector<1x32x32xbf16>
    %56 = vector.shape_cast %55 : vector<1x32x32xbf16> to vector<32x32xbf16>
    %cst_44 = arith.constant dense<0.000000e+00> : vector<32x32xf32>
    %57 = tpu.matmul %54, %56, %cst_44 {dimension_numbers = #tpu.dot_dimension_numbers<[1], [0], [0], [1], [0, 0, 1, 1], [], []>} : vector<32x32xbf16>, vector<32x32xbf16>, vector<32x32xf32> -> vector<32x32xf32>
    %58 = arith.truncf %53 : vector<32x32xf32> to vector<32x32xbf16>
    %c0_45 = arith.constant 0 : index
    %c0_46 = arith.constant 0 : index
    %c0_47 = arith.constant 0 : index
    %59 = vector.load %arg13[%c0_45, %c0_46, %c0_47] : memref<3x32x32xbf16, #tpu.memory_space<vmem>>, vector<1x32x32xbf16>
    %60 = vector.shape_cast %59 : vector<1x32x32xbf16> to vector<32x32xbf16>
    %cst_48 = arith.constant dense<0.000000e+00> : vector<32x32xf32>
    %61 = tpu.matmul %58, %60, %cst_48 {dimension_numbers = #tpu.dot_dimension_numbers<[1], [0], [0], [1], [0, 0, 1, 1], [], []>} : vector<32x32xbf16>, vector<32x32xbf16>, vector<32x32xf32> -> vector<32x32xf32>
    %62 = arith.addf %57, %61 : vector<32x32xf32>
    %cst_49 = arith.constant 0.000000e+00 : f32
    %63 = vector.broadcast %cst_49 : f32 to vector<32x32xf32>
    %64 = arith.maximumf %62, %63 : vector<32x32xf32>
    %65 = vector.shape_cast %64 : vector<32x32xf32> to vector<2x16x32xf32>
    %66 = arith.truncf %65 : vector<2x16x32xf32> to vector<2x16x32xbf16>
    "tpu.trace_start"() <{level = 10 : i32, message = "bij,bjf->bif"}> : () -> ()
    %cst_50 = arith.constant dense<0.000000e+00> : vector<2x16x32xf32>
    %67 = tpu.matmul %9, %66, %cst_50 {dimension_numbers = #tpu.dot_dimension_numbers<[2], [1], [1], [2], [0, 0, 0, 1, 1, 2], [0], [0]>} : vector<2x16x16xbf16>, vector<2x16x32xbf16>, vector<2x16x32xf32> -> vector<2x16x32xf32>
    "tpu.trace_stop"() : () -> ()
    %68 = vector.broadcast %4 : vector<2x16x1xf32> to vector<2x16x32xf32>
    %69 = arith.mulf %67, %68 : vector<2x16x32xf32>
    %70 = vector.shape_cast %69 : vector<2x16x32xf32> to vector<32x32xf32>
    %71 = arith.truncf %70 : vector<32x32xf32> to vector<32x32xbf16>
    %c1 = arith.constant 1 : index
    %c0_51 = arith.constant 0 : index
    %c0_52 = arith.constant 0 : index
    %72 = vector.load %arg10[%c1, %c0_51, %c0_52] : memref<3x32x32xbf16, #tpu.memory_space<vmem>>, vector<1x32x32xbf16>
    %73 = vector.shape_cast %72 : vector<1x32x32xbf16> to vector<32x32xbf16>
    %cst_53 = arith.constant dense<0.000000e+00> : vector<32x32xf32>
    %74 = tpu.matmul %71, %73, %cst_53 {dimension_numbers = #tpu.dot_dimension_numbers<[1], [0], [0], [1], [0, 0, 1, 1], [], []>} : vector<32x32xbf16>, vector<32x32xbf16>, vector<32x32xf32> -> vector<32x32xf32>
    %c1_54 = arith.constant 1 : index
    %c0_55 = arith.constant 0 : index
    %c0_56 = arith.constant 0 : index
    %75 = vector.load %arg11[%c1_54, %c0_55, %c0_56] : memref<3x32x32xbf16, #tpu.memory_space<vmem>>, vector<1x32x32xbf16>
    %76 = vector.shape_cast %75 : vector<1x32x32xbf16> to vector<32x32xbf16>
    %cst_57 = arith.constant dense<0.000000e+00> : vector<32x32xf32>
    %77 = tpu.matmul %37, %76, %cst_57 {dimension_numbers = #tpu.dot_dimension_numbers<[1], [0], [0], [1], [0, 0, 1, 1], [], []>} : vector<32x32xbf16>, vector<32x32xbf16>, vector<32x32xf32> -> vector<32x32xf32>
    %78 = arith.addf %74, %77 : vector<32x32xf32>
    %cst_58 = arith.constant 0.000000e+00 : f32
    %79 = vector.broadcast %cst_58 : f32 to vector<32x32xf32>
    %80 = arith.maximumf %78, %79 : vector<32x32xf32>
    %81 = arith.truncf %64 : vector<32x32xf32> to vector<32x32xbf16>
    %c1_59 = arith.constant 1 : index
    %c0_60 = arith.constant 0 : index
    %c0_61 = arith.constant 0 : index
    %82 = vector.load %arg12[%c1_59, %c0_60, %c0_61] : memref<3x32x32xbf16, #tpu.memory_space<vmem>>, vector<1x32x32xbf16>
    %83 = vector.shape_cast %82 : vector<1x32x32xbf16> to vector<32x32xbf16>
    %cst_62 = arith.constant dense<0.000000e+00> : vector<32x32xf32>
    %84 = tpu.matmul %81, %83, %cst_62 {dimension_numbers = #tpu.dot_dimension_numbers<[1], [0], [0], [1], [0, 0, 1, 1], [], []>} : vector<32x32xbf16>, vector<32x32xbf16>, vector<32x32xf32> -> vector<32x32xf32>
    %85 = arith.truncf %80 : vector<32x32xf32> to vector<32x32xbf16>
    %c1_63 = arith.constant 1 : index
    %c0_64 = arith.constant 0 : index
    %c0_65 = arith.constant 0 : index
    %86 = vector.load %arg13[%c1_63, %c0_64, %c0_65] : memref<3x32x32xbf16, #tpu.memory_space<vmem>>, vector<1x32x32xbf16>
    %87 = vector.shape_cast %86 : vector<1x32x32xbf16> to vector<32x32xbf16>
    %cst_66 = arith.constant dense<0.000000e+00> : vector<32x32xf32>
    %88 = tpu.matmul %85, %87, %cst_66 {dimension_numbers = #tpu.dot_dimension_numbers<[1], [0], [0], [1], [0, 0, 1, 1], [], []>} : vector<32x32xbf16>, vector<32x32xbf16>, vector<32x32xf32> -> vector<32x32xf32>
    %89 = arith.addf %84, %88 : vector<32x32xf32>
    %cst_67 = arith.constant 0.000000e+00 : f32
    %90 = vector.broadcast %cst_67 : f32 to vector<32x32xf32>
    %91 = arith.maximumf %89, %90 : vector<32x32xf32>
    %92 = vector.shape_cast %91 : vector<32x32xf32> to vector<2x16x32xf32>
    %93 = arith.truncf %92 : vector<2x16x32xf32> to vector<2x16x32xbf16>
    "tpu.trace_start"() <{level = 10 : i32, message = "bij,bjf->bif"}> : () -> ()
    %cst_68 = arith.constant dense<0.000000e+00> : vector<2x16x32xf32>
    %94 = tpu.matmul %9, %93, %cst_68 {dimension_numbers = #tpu.dot_dimension_numbers<[2], [1], [1], [2], [0, 0, 0, 1, 1, 2], [0], [0]>} : vector<2x16x16xbf16>, vector<2x16x32xbf16>, vector<2x16x32xf32> -> vector<2x16x32xf32>
    "tpu.trace_stop"() : () -> ()
    %95 = vector.broadcast %4 : vector<2x16x1xf32> to vector<2x16x32xf32>
    %96 = arith.mulf %94, %95 : vector<2x16x32xf32>
    %97 = vector.shape_cast %96 : vector<2x16x32xf32> to vector<32x32xf32>
    %98 = arith.truncf %97 : vector<32x32xf32> to vector<32x32xbf16>
    %c2 = arith.constant 2 : index
    %c0_69 = arith.constant 0 : index
    %c0_70 = arith.constant 0 : index
    %99 = vector.load %arg10[%c2, %c0_69, %c0_70] : memref<3x32x32xbf16, #tpu.memory_space<vmem>>, vector<1x32x32xbf16>
    %100 = vector.shape_cast %99 : vector<1x32x32xbf16> to vector<32x32xbf16>
    %cst_71 = arith.constant dense<0.000000e+00> : vector<32x32xf32>
    %101 = tpu.matmul %98, %100, %cst_71 {dimension_numbers = #tpu.dot_dimension_numbers<[1], [0], [0], [1], [0, 0, 1, 1], [], []>} : vector<32x32xbf16>, vector<32x32xbf16>, vector<32x32xf32> -> vector<32x32xf32>
    %c2_72 = arith.constant 2 : index
    %c0_73 = arith.constant 0 : index
    %c0_74 = arith.constant 0 : index
    %102 = vector.load %arg11[%c2_72, %c0_73, %c0_74] : memref<3x32x32xbf16, #tpu.memory_space<vmem>>, vector<1x32x32xbf16>
    %103 = vector.shape_cast %102 : vector<1x32x32xbf16> to vector<32x32xbf16>
    %cst_75 = arith.constant dense<0.000000e+00> : vector<32x32xf32>
    %104 = tpu.matmul %37, %103, %cst_75 {dimension_numbers = #tpu.dot_dimension_numbers<[1], [0], [0], [1], [0, 0, 1, 1], [], []>} : vector<32x32xbf16>, vector<32x32xbf16>, vector<32x32xf32> -> vector<32x32xf32>
    %105 = arith.addf %101, %104 : vector<32x32xf32>
    %cst_76 = arith.constant 0.000000e+00 : f32
    %106 = vector.broadcast %cst_76 : f32 to vector<32x32xf32>
    %107 = arith.maximumf %105, %106 : vector<32x32xf32>
    %108 = arith.truncf %91 : vector<32x32xf32> to vector<32x32xbf16>
    %c2_77 = arith.constant 2 : index
    %c0_78 = arith.constant 0 : index
    %c0_79 = arith.constant 0 : index
    %109 = vector.load %arg12[%c2_77, %c0_78, %c0_79] : memref<3x32x32xbf16, #tpu.memory_space<vmem>>, vector<1x32x32xbf16>
    %110 = vector.shape_cast %109 : vector<1x32x32xbf16> to vector<32x32xbf16>
    %cst_80 = arith.constant dense<0.000000e+00> : vector<32x32xf32>
    %111 = tpu.matmul %108, %110, %cst_80 {dimension_numbers = #tpu.dot_dimension_numbers<[1], [0], [0], [1], [0, 0, 1, 1], [], []>} : vector<32x32xbf16>, vector<32x32xbf16>, vector<32x32xf32> -> vector<32x32xf32>
    %112 = arith.truncf %107 : vector<32x32xf32> to vector<32x32xbf16>
    %c2_81 = arith.constant 2 : index
    %c0_82 = arith.constant 0 : index
    %c0_83 = arith.constant 0 : index
    %113 = vector.load %arg13[%c2_81, %c0_82, %c0_83] : memref<3x32x32xbf16, #tpu.memory_space<vmem>>, vector<1x32x32xbf16>
    %114 = vector.shape_cast %113 : vector<1x32x32xbf16> to vector<32x32xbf16>
    %cst_84 = arith.constant dense<0.000000e+00> : vector<32x32xf32>
    %115 = tpu.matmul %112, %114, %cst_84 {dimension_numbers = #tpu.dot_dimension_numbers<[1], [0], [0], [1], [0, 0, 1, 1], [], []>} : vector<32x32xbf16>, vector<32x32xbf16>, vector<32x32xf32> -> vector<32x32xf32>
    %116 = arith.addf %111, %115 : vector<32x32xf32>
    %cst_85 = arith.constant 0.000000e+00 : f32
    %117 = vector.broadcast %cst_85 : f32 to vector<32x32xf32>
    %118 = arith.maximumf %116, %117 : vector<32x32xf32>
    %119 = vector.shape_cast %118 : vector<32x32xf32> to vector<2x16x32xf32>
    %cst_86 = arith.constant dense<0.000000e+00> : vector<2x32xf32>
    %120 = vector.multi_reduction <add>, %119, %cst_86 [1] : vector<2x16x32xf32> to vector<2x32xf32>
    %cst_87 = arith.constant 6.250000e-02 : f32
    %121 = vector.broadcast %cst_87 : f32 to vector<2x32xf32>
    %122 = arith.mulf %120, %121 : vector<2x32xf32>
    %123 = arith.truncf %122 : vector<2x32xf32> to vector<2x32xbf16>
    %c0_88 = arith.constant 0 : index
    %c0_89 = arith.constant 0 : index
    %124 = vector.load %arg14[%c0_88, %c0_89] : memref<32x32xbf16, #tpu.memory_space<vmem>>, vector<32x32xbf16>
    %cst_90 = arith.constant dense<0.000000e+00> : vector<2x32xf32>
    %125 = tpu.matmul %123, %124, %cst_90 {dimension_numbers = #tpu.dot_dimension_numbers<[1], [0], [0], [1], [0, 0, 1, 1], [], []>} : vector<2x32xbf16>, vector<32x32xbf16>, vector<2x32xf32> -> vector<2x32xf32>
    %cst_91 = arith.constant 0.000000e+00 : f32
    %126 = vector.broadcast %cst_91 : f32 to vector<2x32xf32>
    %127 = arith.maximumf %125, %126 : vector<2x32xf32>
    %c0_92 = arith.constant 0 : index
    %c0_93 = arith.constant 0 : index
    %128 = vector.load %arg15[%c0_92, %c0_93] : memref<1x32xf32, #tpu.memory_space<vmem>>, vector<1x32xf32>
    %129 = vector.broadcast %128 : vector<1x32xf32> to vector<2x32xf32>
    %130 = arith.mulf %127, %129 : vector<2x32xf32>
    %cst_94 = arith.constant dense<0.000000e+00> : vector<2xf32>
    %131 = vector.multi_reduction <add>, %130, %cst_94 [1] : vector<2x32xf32> to vector<2xf32>
    %132 = vector.shape_cast %131 : vector<2xf32> to vector<2x1xf32>
    %c0_95 = arith.constant 0 : index
    %c0_96 = arith.constant 0 : index
    %133 = vector.load %arg16[%c0_95, %c0_96] : memref<1x32xf32, #tpu.memory_space<vmem>>, vector<1x32xf32>
    %134 = vector.shape_cast %133 : vector<1x32xf32> to vector<1x1x32xf32>
    %135 = vector.broadcast %134 : vector<1x1x32xf32> to vector<2x16x32xf32>
    %136 = arith.mulf %119, %135 : vector<2x16x32xf32>
    %cst_97 = arith.constant dense<0.000000e+00> : vector<2x16xf32>
    %137 = vector.multi_reduction <add>, %136, %cst_97 [2] : vector<2x16x32xf32> to vector<2x16xf32>
    %138 = vector.broadcast %132 : vector<2x1xf32> to vector<2x16xf32>
    %139 = arith.addf %138, %137 : vector<2x16xf32>
    %c0_98 = arith.constant 0 : index
    %c0_99 = arith.constant 0 : index
    %140 = vector.load %arg17[%c0_98, %c0_99] : memref<1x1xf32, #tpu.memory_space<vmem>>, vector<1x1xf32>
    %141 = vector.broadcast %140 : vector<1x1xf32> to vector<2x16xf32>
    %142 = arith.addf %139, %141 : vector<2x16xf32>
    %c0_100 = arith.constant 0 : index
    %c0_101 = arith.constant 0 : index
    %c0_102 = arith.constant 0 : index
    %143 = vector.load %arg18[%c0_100, %c0_101, %c0_102] : memref<1x2x16xf32, #tpu.memory_space<vmem>>, vector<1x2x16xf32>
    %144 = vector.shape_cast %143 : vector<1x2x16xf32> to vector<2x16xf32>
    %145 = vector.shape_cast %142 : vector<2x16xf32> to vector<1x2x16xf32>
    tpu.vector_store %arg18[%c0_100, %c0_101, %c0_102], %145 {strides = array<i32>} : memref<1x2x16xf32, #tpu.memory_space<vmem>>, vector<1x2x16xf32>,
    return
  }
  func.func @transform_0(%arg0: i32) -> (i32, i32, i32, i32) {
    %c0_i32 = arith.constant 0 : i32
    %c0_i32_0 = arith.constant 0 : i32
    %c0_i32_1 = arith.constant 0 : i32
    %c0_i32_2 = arith.constant 0 : i32
    return %arg0, %c0_i32, %c0_i32_0, %c0_i32_1 : i32, i32, i32, i32
  }
  func.func @transform_1(%arg0: i32) -> (i32, i32, i32, i32) {
    %c0_i32 = arith.constant 0 : i32
    %c0_i32_0 = arith.constant 0 : i32
    %c0_i32_1 = arith.constant 0 : i32
    %c0_i32_2 = arith.constant 0 : i32
    return %arg0, %c0_i32, %c0_i32_0, %c0_i32_1 : i32, i32, i32, i32
  }
  func.func @transform_2(%arg0: i32) -> (i32, i32, i32, i32) {
    %c0_i32 = arith.constant 0 : i32
    %c0_i32_0 = arith.constant 0 : i32
    %c0_i32_1 = arith.constant 0 : i32
    %c0_i32_2 = arith.constant 0 : i32
    return %arg0, %c0_i32, %c0_i32_0, %c0_i32_1 : i32, i32, i32, i32
  }
  func.func @transform_3(%arg0: i32) -> (i32, i32, i32, i32) {
    %c0_i32 = arith.constant 0 : i32
    %c0_i32_0 = arith.constant 0 : i32
    %c0_i32_1 = arith.constant 0 : i32
    %c0_i32_2 = arith.constant 0 : i32
    return %arg0, %c0_i32, %c0_i32_0, %c0_i32_1 : i32, i32, i32, i32
  }
  func.func @transform_4(%arg0: i32) -> (i32, i32) {
    %c0_i32 = arith.constant 0 : i32
    %c0_i32_0 = arith.constant 0 : i32
    %c0_i32_1 = arith.constant 0 : i32
    return %c0_i32, %c0_i32_0 : i32, i32
  }
  func.func @transform_5(%arg0: i32) -> (i32, i32) {
    %c0_i32 = arith.constant 0 : i32
    %c0_i32_0 = arith.constant 0 : i32
    %c0_i32_1 = arith.constant 0 : i32
    return %c0_i32, %c0_i32_0 : i32, i32
  }
  func.func @transform_6(%arg0: i32) -> (i32, i32) {
    %c0_i32 = arith.constant 0 : i32
    %c0_i32_0 = arith.constant 0 : i32
    %c0_i32_1 = arith.constant 0 : i32
    return %c0_i32, %c0_i32_0 : i32, i32
  }
  func.func @transform_7(%arg0: i32) -> (i32, i32) {
    %c0_i32 = arith.constant 0 : i32
    %c0_i32_0 = arith.constant 0 : i32
    %c0_i32_1 = arith.constant 0 : i32
    return %c0_i32, %c0_i32_0 : i32, i32
  }
  func.func @transform_8(%arg0: i32) -> (i32, i32) {
    %c0_i32 = arith.constant 0 : i32
    %c0_i32_0 = arith.constant 0 : i32
    %c0_i32_1 = arith.constant 0 : i32
    return %c0_i32, %c0_i32_0 : i32, i32
  }
  func.func @transform_9(%arg0: i32) -> (i32, i32, i32) {
    %c0_i32 = arith.constant 0 : i32
    %c0_i32_0 = arith.constant 0 : i32
    %c0_i32_1 = arith.constant 0 : i32
    %c0_i32_2 = arith.constant 0 : i32
    return %c0_i32, %c0_i32_0, %c0_i32_1 : i32, i32, i32
  }
  func.func @transform_10(%arg0: i32) -> (i32, i32, i32) {
    %c0_i32 = arith.constant 0 : i32
    %c0_i32_0 = arith.constant 0 : i32
    %c0_i32_1 = arith.constant 0 : i32
    %c0_i32_2 = arith.constant 0 : i32
    return %c0_i32, %c0_i32_0, %c0_i32_1 : i32, i32, i32
  }
  func.func @transform_11(%arg0: i32) -> (i32, i32, i32) {
    %c0_i32 = arith.constant 0 : i32
    %c0_i32_0 = arith.constant 0 : i32
    %c0_i32_1 = arith.constant 0 : i32
    %c0_i32_2 = arith.constant 0 : i32
    return %c0_i32, %c0_i32_0, %c0_i32_1 : i32, i32, i32
  }
  func.func @transform_12(%arg0: i32) -> (i32, i32, i32) {
    %c0_i32 = arith.constant 0 : i32
    %c0_i32_0 = arith.constant 0 : i32
    %c0_i32_1 = arith.constant 0 : i32
    %c0_i32_2 = arith.constant 0 : i32
    return %c0_i32, %c0_i32_0, %c0_i32_1 : i32, i32, i32
  }
  func.func @transform_13(%arg0: i32) -> (i32, i32) {
    %c0_i32 = arith.constant 0 : i32
    %c0_i32_0 = arith.constant 0 : i32
    %c0_i32_1 = arith.constant 0 : i32
    return %c0_i32, %c0_i32_0 : i32, i32
  }
  func.func @transform_14(%arg0: i32) -> (i32, i32) {
    %c0_i32 = arith.constant 0 : i32
    %c0_i32_0 = arith.constant 0 : i32
    %c0_i32_1 = arith.constant 0 : i32
    return %c0_i32, %c0_i32_0 : i32, i32
  }
  func.func @transform_15(%arg0: i32) -> (i32, i32) {
    %c0_i32 = arith.constant 0 : i32
    %c0_i32_0 = arith.constant 0 : i32
    %c0_i32_1 = arith.constant 0 : i32
    return %c0_i32, %c0_i32_0 : i32, i32
  }
  func.func @transform_16(%arg0: i32) -> (i32, i32) {
    %c0_i32 = arith.constant 0 : i32
    %c0_i32_0 = arith.constant 0 : i32
    %c0_i32_1 = arith.constant 0 : i32
    return %c0_i32, %c0_i32_0 : i32, i32
  }
  func.func @transform_17(%arg0: i32) -> (i32, i32, i32) {
    %c0_i32 = arith.constant 0 : i32
    %c0_i32_0 = arith.constant 0 : i32
    %c0_i32_1 = arith.constant 0 : i32
    return %arg0, %c0_i32, %c0_i32_0 : i32, i32, i32
  }
}

</mosaic_0001>

<llo_original>
// kernel: mpnn_forward.1
$region0: #{mpnn_forward.1}
  #allocation0 [shape = 'u32[]', space=smem, size = 0x4, offset = 0x4, fixed_abs, tag = 'smem constant byte address 0x4 - core index']
  #allocation1 [shape = 'u32[144,128]{1,0:T(1,128)}', space=vmem, size = 0x12000, scoped, tag = 'internal scratch']
  #allocation2 [shape = 'f32[1,1]{1,0:T(1,128)S(1)}', space=vmem, size = 0x200, scoped, tag = 'scoped memory for mpnn_forward.1']
  %s0 = inlined_call_operand.vmem [shape: bf16[1,2,16,7], index: 0, kind: input, shape index: {}]
  %s1 = inlined_call_operand.vmem [shape: bf16[1,2,16,16], index: 1, kind: input, shape index: {}]
  %s2 = inlined_call_operand.vmem [shape: f32[1,2,16,1], index: 2, kind: input, shape index: {}]
  %s3 = inlined_call_operand.vmem [shape: f32[1,2,16,1], index: 3, kind: input, shape index: {}]
  %s4 = inlined_call_operand.vmem [shape: bf16[7,32], index: 4, kind: input, shape index: {}]
  %s5 = inlined_call_operand.vmem [shape: f32[1,31], index: 5, kind: input, shape index: {}]
  %s6 = inlined_call_operand.vmem [shape: bf16[7,31], index: 6, kind: input, shape index: {}]
  %s7 = inlined_call_operand.vmem [shape: bf16[31,32], index: 7, kind: input, shape index: {}]
  %s8 = inlined_call_operand.vmem [shape: f32[1,32], index: 8, kind: input, shape index: {}]
  %s9 = inlined_call_operand.vmem [shape: bf16[3,32,32], index: 9, kind: input, shape index: {}]
  %s10 = inlined_call_operand.vmem [shape: bf16[3,32,32], index: 10, kind: input, shape index: {}]
  %s11 = inlined_call_operand.vmem [shape: bf16[3,32,32], index: 11, kind: input, shape index: {}]
  %s12 = inlined_call_operand.vmem [shape: bf16[3,32,32], index: 12, kind: input, shape index: {}]
  %s13 = inlined_call_operand.vmem [shape: bf16[32,32], index: 13, kind: input, shape index: {}]
  %s14 = inlined_call_operand.vmem [shape: f32[1,32], index: 14, kind: input, shape index: {}]
  %s15 = inlined_call_operand.vmem [shape: f32[1,32], index: 15, kind: input, shape index: {}]
  %s16 = inlined_call_operand.<no memory space> [shape: f32[1,1], index: 16, kind: input, shape index: {}]
  %s17 = inlined_call_operand.hbm [shape: f32[1,2,16], index: 17, kind: output, shape index: {}]
  %s18 = sld [smem:[#allocation0]]
  $region78: #{mpnn_forward.1} parent=0
    _
  %s20 = ssub.s32 1, %s18
  %s21 = scalar_select 0, %s20, %s18
  %v22 = vstv %s16
  %23 = vst [vmem:[#allocation2] sm:$0x1] %v22
  $region1: #{mpnn_forward.1} parent=0
    #allocation3 [shape = 'u8[1024]{0}', space=vmem, size = 0x400, scoped, tag = 'output window, operand 0, single buffered']
    #allocation4 [shape = 's32[1]{0}', space=sflag, size = 0x4, scoped, tag = 'scoped memory for mpnn_forward.1']
    %24 = vsyncpa [#allocation4], 0
    // Predicated region
    $region2: #{mpnn_forward.1} parent=1 // pred_check
      _
    $region3: #{mpnn_forward.1} parent=1 // pred_check_branch
      %26 = sbr.rel (0) target = $region5
    $region4: #{mpnn_forward.1} parent=1 // pred_region
      _
    $region5: #{mpnn_forward.1} parent=1 // pred_fallthru
      _
    // Predicated region
    $region6: #{mpnn_forward.1} parent=1 // pred_check
      _
    $region7: #{mpnn_forward.1} parent=1 // pred_check_branch
      %28 = sbr.rel (0) target = $region9
    $region8: #{mpnn_forward.1} parent=1 // pred_region
      _
    $region9: #{mpnn_forward.1} parent=1 // pred_fallthru
      _
    // Predicated region
    $region10: #{mpnn_forward.1} parent=1 // pred_check
      _
    $region11: #{mpnn_forward.1} parent=1 // pred_check_branch
      %30 = sbr.rel (0) target = $region13
    $region12: #{mpnn_forward.1} parent=1 // pred_region
      _
    $region13: #{mpnn_forward.1} parent=1 // pred_fallthru
      _
    // Predicated region
    $region14: #{mpnn_forward.1} parent=1 // pred_check
      _
    $region15: #{mpnn_forward.1} parent=1 // pred_check_branch
      %32 = sbr.rel (0) target = $region17
    $region16: #{mpnn_forward.1} parent=1 // pred_region
      _
    $region17: #{mpnn_forward.1} parent=1 // pred_fallthru
      _
    // Predicated region
    $region18: #{mpnn_forward.1} parent=1 // pred_check
      _
    $region19: #{mpnn_forward.1} parent=1 // pred_check_branch
      %34 = sbr.rel (0) target = $region21
    $region20: #{mpnn_forward.1} parent=1 // pred_region
      _
    $region21: #{mpnn_forward.1} parent=1 // pred_fallthru
      _
    // Predicated region
    $region22: #{mpnn_forward.1} parent=1 // pred_check
      _
    $region23: #{mpnn_forward.1} parent=1 // pred_check_branch
      %36 = sbr.rel (0) target = $region25
    $region24: #{mpnn_forward.1} parent=1 // pred_region
      _
    $region25: #{mpnn_forward.1} parent=1 // pred_fallthru
      _
    // Predicated region
    $region26: #{mpnn_forward.1} parent=1 // pred_check
      _
    $region27: #{mpnn_forward.1} parent=1 // pred_check_branch
      %38 = sbr.rel (0) target = $region29
    $region28: #{mpnn_forward.1} parent=1 // pred_region
      _
    $region29: #{mpnn_forward.1} parent=1 // pred_fallthru
      _
    // Predicated region
    $region30: #{mpnn_forward.1} parent=1 // pred_check
      _
    $region31: #{mpnn_forward.1} parent=1 // pred_check_branch
      %40 = sbr.rel (0) target = $region33
    $region32: #{mpnn_forward.1} parent=1 // pred_region
      _
    $region33: #{mpnn_forward.1} parent=1 // pred_fallthru
      _
    // Predicated region
    $region34: #{mpnn_forward.1} parent=1 // pred_check
      _
    $region35: #{mpnn_forward.1} parent=1 // pred_check_branch
      %42 = sbr.rel (0) target = $region37
    $region36: #{mpnn_forward.1} parent=1 // pred_region
      _
    $region37: #{mpnn_forward.1} parent=1 // pred_fallthru
      _
    // Predicated region
    $region38: #{mpnn_forward.1} parent=1 // pred_check
      _
    $region39: #{mpnn_forward.1} parent=1 // pred_check_branch
      %44 = sbr.rel (0) target = $region41
    $region40: #{mpnn_forward.1} parent=1 // pred_region
      _
    $region41: #{mpnn_forward.1} parent=1 // pred_fallthru
      _
    // Predicated region
    $region42: #{mpnn_forward.1} parent=1 // pred_check
      _
    $region43: #{mpnn_forward.1} parent=1 // pred_check_branch
      %46 = sbr.rel (0) target = $region45
    $region44: #{mpnn_forward.1} parent=1 // pred_region
      _
    $region45: #{mpnn_forward.1} parent=1 // pred_fallthru
      _
    // Predicated region
    $region46: #{mpnn_forward.1} parent=1 // pred_check
      _
    $region47: #{mpnn_forward.1} parent=1 // pred_check_branch
      %48 = sbr.rel (0) target = $region49
    $region48: #{mpnn_forward.1} parent=1 // pred_region
      _
    $region49: #{mpnn_forward.1} parent=1 // pred_fallthru
      _
    // Predicated region
    $region50: #{mpnn_forward.1} parent=1 // pred_check
      _
    $region51: #{mpnn_forward.1} parent=1 // pred_check_branch
      %50 = sbr.rel (0) target = $region53
    $region52: #{mpnn_forward.1} parent=1 // pred_region
      _
    $region53: #{mpnn_forward.1} parent=1 // pred_fallthru
      _
    // Predicated region
    $region54: #{mpnn_forward.1} parent=1 // pred_check
      _
    $region55: #{mpnn_forward.1} parent=1 // pred_check_branch
      %52 = sbr.rel (0) target = $region57
    $region56: #{mpnn_forward.1} parent=1 // pred_region
      _
    $region57: #{mpnn_forward.1} parent=1 // pred_fallthru
      _
    // Predicated region
    $region58: #{mpnn_forward.1} parent=1 // pred_check
      _
    $region59: #{mpnn_forward.1} parent=1 // pred_check_branch
      %54 = sbr.rel (0) target = $region61
    $region60: #{mpnn_forward.1} parent=1 // pred_region
      _
    $region61: #{mpnn_forward.1} parent=1 // pred_fallthru
      _
    // Predicated region
    $region62: #{mpnn_forward.1} parent=1 // pred_check
      _
    $region63: #{mpnn_forward.1} parent=1 // pred_check_branch
      %56 = sbr.rel (0) target = $region65
    $region64: #{mpnn_forward.1} parent=1 // pred_region
      _
    $region65: #{mpnn_forward.1} parent=1 // pred_fallthru
      _
    // Predicated region
    $region66: #{mpnn_forward.1} parent=1 // pred_check
      _
    $region67: #{mpnn_forward.1} parent=1 // pred_check_branch
      %58 = sbr.rel (0) target = $region69
    $region68: #{mpnn_forward.1} parent=1 // pred_region
      _
    $region69: #{mpnn_forward.1} parent=1 // pred_fallthru
      _
    %v60 = vld [vmem:[%s0] sm:$0xf]
    %v61 = vld [vmem:[%s0 + $0x4] sm:$0xf]
    %v62 = vld [vmem:[%s0 + $0x8] sm:$0xf]
    %v63 = vld [vmem:[%s0 + $0xc] sm:$0xf]
    %v64 = vld [vmem:[%s2] sm:$0xff]
    %v65 = vld [vmem:[%s2 + $0x8] sm:$0xff]
    %v66 = vld [vmem:[%s2 + $0x10] sm:$0xff]
    %v67 = vld [vmem:[%s2 + $0x18] sm:$0xff]
    %v68 = vld [vmem:[%s3] sm:$0xff]
    %v69 = vld [vmem:[%s3 + $0x8] sm:$0xff]
    %v70 = vld [vmem:[%s3 + $0x10] sm:$0xff]
    %v71 = vld [vmem:[%s3 + $0x18] sm:$0xff]
    %v72 = vld [vmem:[%s1] sm:$0xf]
    %v73 = vld [vmem:[%s1 + $0x4] sm:$0xf]
    %v74 = vld [vmem:[%s1 + $0x8] sm:$0xf]
    %v75 = vld [vmem:[%s1 + $0xc] sm:$0xf]
    %v76 = vld [vmem:[%s4] sm:$0xf]
    %v81 = vunpack.c.l.b16 %v60
    %v82 = vunpack.c.l.b16 %v61
    %v83 = vunpack.c.l.b16 %v62
    %v84 = vunpack.c.l.b16 %v63
    %v85 = vpack.c.b16 %v82, %v81
    %v86 = vpack.c.b16 %v84, %v83
    %vm87 = vcmask 56320
    %v89 = vsel %vm87, %v85, 0
    %v92 = vsel %vm87, %v86, 0
    %vm94 = vcmask 1042432
    %vm95 = vcmask 1043456
    %v96 = vsel %vm94, 4294967295, 65535
    %v97 = vsel %vm95, %v96, 0
    %v99 = vand.u32 %v76, %v97
    %101 = vmatprep.subr.bf16.mxu0 0
    %102 = vmatpush1.bf16.msra.mxu0 %v99
    %103 = vmatprep.subr.bf16.mxu0 0
    %104 = vmatpush1.bf16.msra.mxu0 0
    %105 = vmatprep.subr.bf16.mxu0 0
    %106 = vmatpush1.bf16.msra.mxu0 0
    %107 = vmatprep.subr.bf16.mxu0 0
    %108 = vmatpush1.bf16.msra.mxu0 0
    %109 = vmatprep.subr.bf16.mxu0 0
    %110 = vmatpush1.bf16.msra.mxu0 0
    %111 = vmatprep.subr.bf16.mxu0 0
    %112 = vmatpush1.bf16.msra.mxu0 0
    %113 = vmatprep.subr.bf16.mxu0 0
    %114 = vmatpush1.bf16.msra.mxu0 0
    %115 = vmatprep.subr.bf16.mxu0 0
    %116 = vmatpush1.bf16.msra.mxu0 0
    %117 = vmatprep.subr.bf16.mxu0 0
    %118 = vmatpush1.bf16.msra.mxu0 0
    %119 = vmatprep.subr.bf16.mxu0 0
    %120 = vmatpush1.bf16.msra.mxu0 0
    %121 = vmatprep.subr.bf16.mxu0 0
    %122 = vmatpush1.bf16.msra.mxu0 0
    %123 = vmatprep.subr.bf16.mxu0 0
    %124 = vmatpush1.bf16.msra.mxu0 0
    %125 = vmatprep.subr.bf16.mxu0 0
    %126 = vmatpush1.bf16.msra.mxu0 0
    %127 = vmatprep.subr.bf16.mxu0 0
    %128 = vmatpush1.bf16.msra.mxu0 0
    %129 = vmatprep.subr.bf16.mxu0 0
    %130 = vmatpush1.bf16.msra.mxu0 0
    %131 = vmatprep.subr.bf16.mxu0 0
    %132 = vmatpush1.bf16.msra.mxu0 0
    %133 = vmatprep.mubr.bf16.mxu0 0
    %134 = vmatmul.mubr.bf16.gmra.mrb[0].mxu0 %v89
    %v135 = vpop.f32.mrb[0].mxu0
    %v136 = vadd.f32 0.0, %v135
    %v137 = vpop.f32.mrb[0].mxu0
    %v138 = vpop.f32.mrb[0].mxu0
    %v139 = vadd.f32 0.0, %v138
    %v140 = vpop.f32.mrb[0].mxu0
    %141 = vmatprep.mubr.bf16.mxu0 0
    %142 = vmatmul.mubr.bf16.gmra.mrb[0].mxu0 %v92
    %v143 = vpop.f32.mrb[0].mxu0
    %v144 = vadd.f32 0.0, %v143
    %v145 = vpop.f32.mrb[0].mxu0
    %v146 = vpop.f32.mrb[0].mxu0
    %v147 = vadd.f32 0.0, %v146
    %v148 = vpop.f32.mrb[0].mxu0
    %149 = vdwg.mxu0
    %v150 = vmax.f32 %v136, 0.0
    %v151 = vmax.f32 %v139, 0.0
    %v152 = vmax.f32 %v144, 0.0
    %v153 = vmax.f32 %v147, 0.0
    %v154 = vld [vmem:[%s6] sm:$0xf]
    %v155 = vld [vmem:[%s5] sm:$0x1]
    %v157 = vlaneseq
    %v158 = vshrl.u32 %v157, 7
    %v159 = vsub.s32 0, %v158
    %v160 = vrot.slane %v155, %v159
    %v163 = vand.u32 %v154, %v97
    %165 = vmatprep.subr.bf16.mxu0 0
    %166 = vmatpush1.bf16.msra.mxu0 %v163
    %167 = vmatprep.subr.bf16.mxu0 0
    %168 = vmatpush1.bf16.msra.mxu0 0
    %169 = vmatprep.subr.bf16.mxu0 0
    %170 = vmatpush1.bf16.msra.mxu0 0
    %171 = vmatprep.subr.bf16.mxu0 0
    %172 = vmatpush1.bf16.msra.mxu0 0
    %173 = vmatprep.subr.bf16.mxu0 0
    %174 = vmatpush1.bf16.msra.mxu0 0
    %175 = vmatprep.subr.bf16.mxu0 0
    %176 = vmatpush1.bf16.msra.mxu0 0
    %177 = vmatprep.subr.bf16.mxu0 0
    %178 = vmatpush1.bf16.msra.mxu0 0
    %179 = vmatprep.subr.bf16.mxu0 0
    %180 = vmatpush1.bf16.msra.mxu0 0
    %181 = vmatprep.subr.bf16.mxu0 0
    %182 = vmatpush1.bf16.msra.mxu0 0
    %183 = vmatprep.subr.bf16.mxu0 0
    %184 = vmatpush1.bf16.msra.mxu0 0
    %185 = vmatprep.subr.bf16.mxu0 0
    %186 = vmatpush1.bf16.msra.mxu0 0
    %187 = vmatprep.subr.bf16.mxu0 0
    %188 = vmatpush1.bf16.msra.mxu0 0
    %189 = vmatprep.subr.bf16.mxu0 0
    %190 = vmatpush1.bf16.msra.mxu0 0
    %191 = vmatprep.subr.bf16.mxu0 0
    %192 = vmatpush1.bf16.msra.mxu0 0
    %193 = vmatprep.subr.bf16.mxu0 0
    %194 = vmatpush1.bf16.msra.mxu0 0
    %195 = vmatprep.subr.bf16.mxu0 0
    %196 = vmatpush1.bf16.msra.mxu0 0
    %197 = vmatprep.mubr.bf16.mxu0 0
    %198 = vmatmul.mubr.bf16.gmra.mrb[0].mxu0 %v89
    %v199 = vpop.f32.mrb[0].mxu0
    %v200 = vadd.f32 %v160, %v199
    %v201 = vpop.f32.mrb[0].mxu0
    %v202 = vpop.f32.mrb[0].mxu0
    %v203 = vadd.f32 %v160, %v202
    %v204 = vpop.f32.mrb[0].mxu0
    %205 = vmatprep.mubr.bf16.mxu0 0
    %206 = vmatmul.mubr.bf16.gmra.mrb[0].mxu0 %v92
    %v207 = vpop.f32.mrb[0].mxu0
    %v208 = vadd.f32 %v160, %v207
    %v209 = vpop.f32.mrb[0].mxu0
    %v210 = vpop.f32.mrb[0].mxu0
    %v211 = vadd.f32 %v160, %v210
    %v212 = vpop.f32.mrb[0].mxu0
    %213 = vdwg.mxu0
    %v214 = vmax.f32 %v200, 0.0
    %v215 = vmax.f32 %v203, 0.0
    %v216 = vmax.f32 %v208, 0.0
    %v217 = vmax.f32 %v211, 0.0
    %v218 = vpack.c.bf16 %v215, %v214
    %v219 = vpack.c.bf16 %v217, %v216
    %v222 = vunpack.c.l.b16 %v72
    %v223 = vunpack.c.l.b16 %v73
    %v224 = vpack.c.b16 %v223, %v222
    %vm225 = vcmask 130048
    %v227 = vsel %vm225, %v224, 0
    %229 = vmatprep.subr.bf16.mxu0 0
    %230 = vmatpush1.bf16.msra.mxu0 %v218
    %231 = vmatprep.subr.bf16.mxu0 0
    %232 = vmatpush1.bf16.msra.mxu0 0
    %233 = vmatprep.subr.bf16.mxu0 0
    %234 = vmatpush1.bf16.msra.mxu0 0
    %235 = vmatprep.subr.bf16.mxu0 0
    %236 = vmatpush1.bf16.msra.mxu0 0
    %237 = vmatprep.subr.bf16.mxu0 0
    %238 = vmatpush1.bf16.msra.mxu0 0
    %239 = vmatprep.subr.bf16.mxu0 0
    %240 = vmatpush1.bf16.msra.mxu0 0
    %241 = vmatprep.subr.bf16.mxu0 0
    %242 = vmatpush1.bf16.msra.mxu0 0
    %243 = vmatprep.subr.bf16.mxu0 0
    %244 = vmatpush1.bf16.msra.mxu0 0
    %245 = vmatprep.subr.bf16.mxu0 0
    %246 = vmatpush1.bf16.msra.mxu0 0
    %247 = vmatprep.subr.bf16.mxu0 0
    %248 = vmatpush1.bf16.msra.mxu0 0
    %249 = vmatprep.subr.bf16.mxu0 0
    %250 = vmatpush1.bf16.msra.mxu0 0
    %251 = vmatprep.subr.bf16.mxu0 0
    %252 = vmatpush1.bf16.msra.mxu0 0
    %253 = vmatprep.subr.bf16.mxu0 0
    %254 = vmatpush1.bf16.msra.mxu0 0
    %255 = vmatprep.subr.bf16.mxu0 0
    %256 = vmatpush1.bf16.msra.mxu0 0
    %257 = vmatprep.subr.bf16.mxu0 0
    %258 = vmatpush1.bf16.msra.mxu0 0
    %259 = vmatprep.subr.bf16.mxu0 0
    %260 = vmatpush1.bf16.msra.mxu0 0
    %261 = vmatprep.mubr.bf16.mxu0 0
    %262 = vmatmul.mubr.bf16.gmra.mrb[0].mxu0 %v227
    %v263 = vpop.f32.mrb[0].mxu0
    %v264 = vadd.f32 0.0, %v263
    %v265 = vpop.f32.mrb[0].mxu0
    %v266 = vpop.f32.mrb[0].mxu0
    %v267 = vadd.f32 0.0, %v266
    %v268 = vpop.f32.mrb[0].mxu0
    %269 = vdwg.mxu0
    %v272 = vunpack.c.l.b16 %v74
    %v273 = vunpack.c.l.b16 %v75
    %v274 = vpack.c.b16 %v273, %v272
    %v276 = vsel %vm225, %v274, 0
    %278 = vmatprep.subr.bf16.mxu0 0
    %279 = vmatpush1.bf16.msra.mxu0 %v219
    %280 = vmatprep.subr.bf16.mxu0 0
    %281 = vmatpush1.bf16.msra.mxu0 0
    %282 = vmatprep.subr.bf16.mxu0 0
    %283 = vmatpush1.bf16.msra.mxu0 0
    %284 = vmatprep.subr.bf16.mxu0 0
    %285 = vmatpush1.bf16.msra.mxu0 0
    %286 = vmatprep.subr.bf16.mxu0 0
    %287 = vmatpush1.bf16.msra.mxu0 0
    %288 = vmatprep.subr.bf16.mxu0 0
    %289 = vmatpush1.bf16.msra.mxu0 0
    %290 = vmatprep.subr.bf16.mxu0 0
    %291 = vmatpush1.bf16.msra.mxu0 0
    %292 = vmatprep.subr.bf16.mxu0 0
    %293 = vmatpush1.bf16.msra.mxu0 0
    %294 = vmatprep.subr.bf16.mxu0 0
    %295 = vmatpush1.bf16.msra.mxu0 0
    %296 = vmatprep.subr.bf16.mxu0 0
    %297 = vmatpush1.bf16.msra.mxu0 0
    %298 = vmatprep.subr.bf16.mxu0 0
    %299 = vmatpush1.bf16.msra.mxu0 0
    %300 = vmatprep.subr.bf16.mxu0 0
    %301 = vmatpush1.bf16.msra.mxu0 0
    %302 = vmatprep.subr.bf16.mxu0 0
    %303 = vmatpush1.bf16.msra.mxu0 0
    %304 = vmatprep.subr.bf16.mxu0 0
    %305 = vmatpush1.bf16.msra.mxu0 0
    %306 = vmatprep.subr.bf16.mxu0 0
    %307 = vmatpush1.bf16.msra.mxu0 0
    %308 = vmatprep.subr.bf16.mxu0 0
    %309 = vmatpush1.bf16.msra.mxu0 0
    %310 = vmatprep.mubr.bf16.mxu0 0
    %311 = vmatmul.mubr.bf16.gmra.mrb[0].mxu0 %v276
    %v312 = vpop.f32.mrb[0].mxu0
    %v313 = vadd.f32 0.0, %v312
    %v314 = vpop.f32.mrb[0].mxu0
    %v315 = vpop.f32.mrb[0].mxu0
    %v316 = vadd.f32 0.0, %v315
    %v317 = vpop.f32.mrb[0].mxu0
    %318 = vdwg.mxu0
    %320 = vset.pattern.permute.xlu0 0
    %321 = vperm.xlu0 %320, %v64
    %v322 = vpop.permute.xlu0 %321
    %325 = vset.pattern.permute.xlu0 0
    %326 = vperm.xlu0 %325, %v65
    %v327 = vpop.permute.xlu0 %326
    %330 = vset.pattern.permute.xlu0 0
    %331 = vperm.xlu0 %330, %v66
    %v332 = vpop.permute.xlu0 %331
    %335 = vset.pattern.permute.xlu0 0
    %336 = vperm.xlu0 %335, %v67
    %v337 = vpop.permute.xlu0 %336
    %v339 = vmul.f32 %v264, %v322
    %v340 = vmul.f32 %v267, %v327
    %v341 = vmul.f32 %v313, %v332
    %v342 = vmul.f32 %v316, %v337
    %v343 = vpack.c.bf16 %v340, %v339
    %v344 = vpack.c.bf16 %v342, %v341
    %v345 = vld [vmem:[%s7] sm:$0xf]
    %v346 = vld [vmem:[%s7 + $0x4] sm:$0xf]
    %v347 = vld [vmem:[%s7 + $0x8] sm:$0xf]
    %v348 = vld [vmem:[%s7 + $0xc] sm:$0xf]
    %v349 = vld [vmem:[%s8] sm:$0x1]
    %351 = vset.pattern.permute.xlu0 0
    %352 = vperm.xlu0 %351, %v68
    %v353 = vpop.permute.xlu0 %352
    %356 = vset.pattern.permute.xlu0 0
    %357 = vperm.xlu0 %356, %v69
    %v358 = vpop.permute.xlu0 %357
    %361 = vset.pattern.permute.xlu0 0
    %362 = vperm.xlu0 %361, %v70
    %v363 = vpop.permute.xlu0 %362
    %366 = vset.pattern.permute.xlu0 0
    %367 = vperm.xlu0 %366, %v71
    %v368 = vpop.permute.xlu0 %367
    %v371 = vlaneseq
    %v372 = vshrl.u32 %v371, 7
    %v373 = vsub.s32 0, %v372
    %v374 = vrot.slane %v349, %v373
    %v376 = vmul.f32 %v353, %v374
    %v377 = vmul.f32 %v358, %v374
    %v378 = vmul.f32 %v363, %v374
    %v379 = vmul.f32 %v368, %v374
    %v384 = vunpack.c.l.b16 %v345
    %v385 = vunpack.c.l.b16 %v346
    %v386 = vunpack.c.l.b16 %v347
    %v387 = vunpack.c.l.b16 %v348
    %v388 = vpack.c.b16 %v385, %v384
    %v389 = vpack.c.b16 %v387, %v386
    %vm391 = vcmask 252928
    %v393 = vsel %vm391, %v343, 0
    %v396 = vsel %vm391, %v344, 0
    %vm398 = vcmask 1046528
    %vm399 = vcmask 1047552
    %v400 = vsel %vm398, 4294967295, 65535
    %v401 = vsel %vm399, %v400, 0
    %v403 = vand.u32 %v389, %v401
    %405 = vmatprep.subr.bf16.mxu0 0
    %406 = vmatpush1.bf16.msra.mxu0 %v388
    %407 = vmatprep.subr.bf16.mxu0 0
    %408 = vmatpush1.bf16.msra.mxu0 %v403
    %409 = vmatprep.subr.bf16.mxu0 0
    %410 = vmatpush1.bf16.msra.mxu0 0
    %411 = vmatprep.subr.bf16.mxu0 0
    %412 = vmatpush1.bf16.msra.mxu0 0
    %413 = vmatprep.subr.bf16.mxu0 0
    %414 = vmatpush1.bf16.msra.mxu0 0
    %415 = vmatprep.subr.bf16.mxu0 0
    %416 = vmatpush1.bf16.msra.mxu0 0
    %417 = vmatprep.subr.bf16.mxu0 0
    %418 = vmatpush1.bf16.msra.mxu0 0
    %419 = vmatprep.subr.bf16.mxu0 0
    %420 = vmatpush1.bf16.msra.mxu0 0
    %421 = vmatprep.subr.bf16.mxu0 0
    %422 = vmatpush1.bf16.msra.mxu0 0
    %423 = vmatprep.subr.bf16.mxu0 0
    %424 = vmatpush1.bf16.msra.mxu0 0
    %425 = vmatprep.subr.bf16.mxu0 0
    %426 = vmatpush1.bf16.msra.mxu0 0
    %427 = vmatprep.subr.bf16.mxu0 0
    %428 = vmatpush1.bf16.msra.mxu0 0
    %429 = vmatprep.subr.bf16.mxu0 0
    %430 = vmatpush1.bf16.msra.mxu0 0
    %431 = vmatprep.subr.bf16.mxu0 0
    %432 = vmatpush1.bf16.msra.mxu0 0
    %433 = vmatprep.subr.bf16.mxu0 0
    %434 = vmatpush1.bf16.msra.mxu0 0
    %435 = vmatprep.subr.bf16.mxu0 0
    %436 = vmatpush1.bf16.msra.mxu0 0
    %437 = vmatprep.mubr.bf16.mxu0 0
    %438 = vmatmul.mubr.bf16.gmra.mrb[0].mxu0 %v393
    %v439 = vpop.f32.mrb[0].mxu0
    %v440 = vadd.f32 %v376, %v439
    %v441 = vpop.f32.mrb[0].mxu0
    %v442 = vpop.f32.mrb[0].mxu0
    %v443 = vadd.f32 %v377, %v442
    %v444 = vpop.f32.mrb[0].mxu0
    %445 = vmatprep.mubr.bf16.mxu0 0
    %446 = vmatmul.mubr.bf16.gmra.mrb[0].mxu0 %v396
    %v447 = vpop.f32.mrb[0].mxu0
    %v448 = vadd.f32 %v378, %v447
    %v449 = vpop.f32.mrb[0].mxu0
    %v450 = vpop.f32.mrb[0].mxu0
    %v451 = vadd.f32 %v379, %v450
    %v452 = vpop.f32.mrb[0].mxu0
    %453 = vdwg.mxu0
    %v454 = vmax.f32 %v440, 0.0
    %v455 = vmax.f32 %v443, 0.0
    %v456 = vmax.f32 %v448, 0.0
    %v457 = vmax.f32 %v451, 0.0
    %v458 = vpack.c.bf16 %v455, %v454
    %v459 = vpack.c.bf16 %v457, %v456
    %v460 = vpack.c.bf16 %v151, %v150
    %v461 = vpack.c.bf16 %v153, %v152
    %462 = vmatprep.subr.bf16.mxu0 0
    %463 = vmatpush1.bf16.msra.mxu0 %v460
    %464 = vmatprep.subr.bf16.mxu0 0
    %465 = vmatpush1.bf16.msra.mxu0 0
    %466 = vmatprep.subr.bf16.mxu0 0
    %467 = vmatpush1.bf16.msra.mxu0 0
    %468 = vmatprep.subr.bf16.mxu0 0
    %469 = vmatpush1.bf16.msra.mxu0 0
    %470 = vmatprep.subr.bf16.mxu0 0
    %471 = vmatpush1.bf16.msra.mxu0 0
    %472 = vmatprep.subr.bf16.mxu0 0
    %473 = vmatpush1.bf16.msra.mxu0 0
    %474 = vmatprep.subr.bf16.mxu0 0
    %475 = vmatpush1.bf16.msra.mxu0 0
    %476 = vmatprep.subr.bf16.mxu0 0
    %477 = vmatpush1.bf16.msra.mxu0 0
    %478 = vmatprep.subr.bf16.mxu0 0
    %479 = vmatpush1.bf16.msra.mxu0 0
    %480 = vmatprep.subr.bf16.mxu0 0
    %481 = vmatpush1.bf16.msra.mxu0 0
    %482 = vmatprep.subr.bf16.mxu0 0
    %483 = vmatpush1.bf16.msra.mxu0 0
    %484 = vmatprep.subr.bf16.mxu0 0
    %485 = vmatpush1.bf16.msra.mxu0 0
    %486 = vmatprep.subr.bf16.mxu0 0
    %487 = vmatpush1.bf16.msra.mxu0 0
    %488 = vmatprep.subr.bf16.mxu0 0
    %489 = vmatpush1.bf16.msra.mxu0 0
    %490 = vmatprep.subr.bf16.mxu0 0
    %491 = vmatpush1.bf16.msra.mxu0 0
    %492 = vmatprep.subr.bf16.mxu0 0
    %493 = vmatpush1.bf16.msra.mxu0 0
    %494 = vmatprep.mubr.bf16.mxu0 0
    %495 = vmatmul.mubr.bf16.gmra.mrb[0].mxu0 %v227
    %v496 = vpop.f32.mrb[0].mxu0
    %v497 = vadd.f32 0.0, %v496
    %v498 = vpop.f32.mrb[0].mxu0
    %v499 = vpop.f32.mrb[0].mxu0
    %v500 = vadd.f32 0.0, %v499
    %v501 = vpop.f32.mrb[0].mxu0
    %502 = vdwg.mxu0
    %503 = vmatprep.subr.bf16.mxu0 0
    %504 = vmatpush1.bf16.msra.mxu0 %v461
    %505 = vmatprep.subr.bf16.mxu0 0
    %506 = vmatpush1.bf16.msra.mxu0 0
    %507 = vmatprep.subr.bf16.mxu0 0
    %508 = vmatpush1.bf16.msra.mxu0 0
    %509 = vmatprep.subr.bf16.mxu0 0
    %510 = vmatpush1.bf16.msra.mxu0 0
    %511 = vmatprep.subr.bf16.mxu0 0
    %512 = vmatpush1.bf16.msra.mxu0 0
    %513 = vmatprep.subr.bf16.mxu0 0
    %514 = vmatpush1.bf16.msra.mxu0 0
    %515 = vmatprep.subr.bf16.mxu0 0
    %516 = vmatpush1.bf16.msra.mxu0 0
    %517 = vmatprep.subr.bf16.mxu0 0
    %518 = vmatpush1.bf16.msra.mxu0 0
    %519 = vmatprep.subr.bf16.mxu0 0
    %520 = vmatpush1.bf16.msra.mxu0 0
    %521 = vmatprep.subr.bf16.mxu0 0
    %522 = vmatpush1.bf16.msra.mxu0 0
    %523 = vmatprep.subr.bf16.mxu0 0
    %524 = vmatpush1.bf16.msra.mxu0 0
    %525 = vmatprep.subr.bf16.mxu0 0
    %526 = vmatpush1.bf16.msra.mxu0 0
    %527 = vmatprep.subr.bf16.mxu0 0
    %528 = vmatpush1.bf16.msra.mxu0 0
    %529 = vmatprep.subr.bf16.mxu0 0
    %530 = vmatpush1.bf16.msra.mxu0 0
    %531 = vmatprep.subr.bf16.mxu0 0
    %532 = vmatpush1.bf16.msra.mxu0 0
    %533 = vmatprep.subr.bf16.mxu0 0
    %534 = vmatpush1.bf16.msra.mxu0 0
    %535 = vmatprep.mubr.bf16.mxu0 0
    %536 = vmatmul.mubr.bf16.gmra.mrb[0].mxu0 %v276
    %v537 = vpop.f32.mrb[0].mxu0
    %v538 = vadd.f32 0.0, %v537
    %v539 = vpop.f32.mrb[0].mxu0
    %v540 = vpop.f32.mrb[0].mxu0
    %v541 = vadd.f32 0.0, %v540
    %v542 = vpop.f32.mrb[0].mxu0
    %543 = vdwg.mxu0
    %v544 = vmul.f32 %v497, %v322
    %v545 = vmul.f32 %v500, %v327
    %v546 = vmul.f32 %v538, %v332
    %v547 = vmul.f32 %v541, %v337
    %v548 = vpack.c.bf16 %v545, %v544
    %v549 = vpack.c.bf16 %v547, %v546
    %v550 = vld [vmem:[%s9] sm:$0xf]
    %v551 = vld [vmem:[%s9 + $0x4] sm:$0xf]
    %v552 = vld [vmem:[%s9 + $0x8] sm:$0xf]
    %v553 = vld [vmem:[%s9 + $0xc] sm:$0xf]
    %v554 = vld [vmem:[%s10] sm:$0xf]
    %v555 = vld [vmem:[%s10 + $0x4] sm:$0xf]
    %v556 = vld [vmem:[%s10 + $0x8] sm:$0xf]
    %v557 = vld [vmem:[%s10 + $0xc] sm:$0xf]
    %v562 = vunpack.c.l.b16 %v554
    %v563 = vunpack.c.l.b16 %v555
    %v564 = vunpack.c.l.b16 %v556
    %v565 = vunpack.c.l.b16 %v557
    %v566 = vpack.c.b16 %v563, %v562
    %v567 = vpack.c.b16 %v565, %v564
    %vm570 = vcmask 261120
    %v572 = vsel %vm570, %v458, 0
    %v575 = vsel %vm570, %v459, 0
    %577 = vmatprep.subr.bf16.mxu0 0
    %578 = vmatpush1.bf16.msra.mxu0 %v566
    %579 = vmatprep.subr.bf16.mxu0 0
    %580 = vmatpush1.bf16.msra.mxu0 %v567
    %581 = vmatprep.subr.bf16.mxu0 0
    %582 = vmatpush1.bf16.msra.mxu0 0
    %583 = vmatprep.subr.bf16.mxu0 0
    %584 = vmatpush1.bf16.msra.mxu0 0
    %585 = vmatprep.subr.bf16.mxu0 0
    %586 = vmatpush1.bf16.msra.mxu0 0
    %587 = vmatprep.subr.bf16.mxu0 0
    %588 = vmatpush1.bf16.msra.mxu0 0
    %589 = vmatprep.subr.bf16.mxu0 0
    %590 = vmatpush1.bf16.msra.mxu0 0
    %591 = vmatprep.subr.bf16.mxu0 0
    %592 = vmatpush1.bf16.msra.mxu0 0
    %593 = vmatprep.subr.bf16.mxu0 0
    %594 = vmatpush1.bf16.msra.mxu0 0
    %595 = vmatprep.subr.bf16.mxu0 0
    %596 = vmatpush1.bf16.msra.mxu0 0
    %597 = vmatprep.subr.bf16.mxu0 0
    %598 = vmatpush1.bf16.msra.mxu0 0
    %599 = vmatprep.subr.bf16.mxu0 0
    %600 = vmatpush1.bf16.msra.mxu0 0
    %601 = vmatprep.subr.bf16.mxu0 0
    %602 = vmatpush1.bf16.msra.mxu0 0
    %603 = vmatprep.subr.bf16.mxu0 0
    %604 = vmatpush1.bf16.msra.mxu0 0
    %605 = vmatprep.subr.bf16.mxu0 0
    %606 = vmatpush1.bf16.msra.mxu0 0
    %607 = vmatprep.subr.bf16.mxu0 0
    %608 = vmatpush1.bf16.msra.mxu0 0
    %609 = vmatprep.mubr.bf16.mxu0 0
    %610 = vmatmul.mubr.bf16.gmra.mrb[0].mxu0 %v572
    %v611 = vpop.f32.mrb[0].mxu0
    %v612 = vadd.f32 0.0, %v611
    %v613 = vpop.f32.mrb[0].mxu0
    %v614 = vpop.f32.mrb[0].mxu0
    %v615 = vadd.f32 0.0, %v614
    %v616 = vpop.f32.mrb[0].mxu0
    %617 = vmatprep.mubr.bf16.mxu0 0
    %618 = vmatmul.mubr.bf16.gmra.mrb[0].mxu0 %v575
    %v619 = vpop.f32.mrb[0].mxu0
    %v620 = vadd.f32 0.0, %v619
    %v621 = vpop.f32.mrb[0].mxu0
    %v622 = vpop.f32.mrb[0].mxu0
    %v623 = vadd.f32 0.0, %v622
    %v624 = vpop.f32.mrb[0].mxu0
    %625 = vdwg.mxu0
    %v630 = vunpack.c.l.b16 %v550
    %v631 = vunpack.c.l.b16 %v551
    %v632 = vunpack.c.l.b16 %v552
    %v633 = vunpack.c.l.b16 %v553
    %v634 = vpack.c.b16 %v631, %v630
    %v635 = vpack.c.b16 %v633, %v632
    %v639 = vsel %vm570, %v548, 0
    %v642 = vsel %vm570, %v549, 0
    %644 = vmatprep.subr.bf16.mxu0 0
    %645 = vmatpush1.bf16.msra.mxu0 %v634
    %646 = vmatprep.subr.bf16.mxu0 0
    %647 = vmatpush1.bf16.msra.mxu0 %v635
    %648 = vmatprep.subr.bf16.mxu0 0
    %649 = vmatpush1.bf16.msra.mxu0 0
    %650 = vmatprep.subr.bf16.mxu0 0
    %651 = vmatpush1.bf16.msra.mxu0 0
    %652 = vmatprep.subr.bf16.mxu0 0
    %653 = vmatpush1.bf16.msra.mxu0 0
    %654 = vmatprep.subr.bf16.mxu0 0
    %655 = vmatpush1.bf16.msra.mxu0 0
    %656 = vmatprep.subr.bf16.mxu0 0
    %657 = vmatpush1.bf16.msra.mxu0 0
    %658 = vmatprep.subr.bf16.mxu0 0
    %659 = vmatpush1.bf16.msra.mxu0 0
    %660 = vmatprep.subr.bf16.mxu0 0
    %661 = vmatpush1.bf16.msra.mxu0 0
    %662 = vmatprep.subr.bf16.mxu0 0
    %663 = vmatpush1.bf16.msra.mxu0 0
    %664 = vmatprep.subr.bf16.mxu0 0
    %665 = vmatpush1.bf16.msra.mxu0 0
    %666 = vmatprep.subr.bf16.mxu0 0
    %667 = vmatpush1.bf16.msra.mxu0 0
    %668 = vmatprep.subr.bf16.mxu0 0
    %669 = vmatpush1.bf16.msra.mxu0 0
    %670 = vmatprep.subr.bf16.mxu0 0
    %671 = vmatpush1.bf16.msra.mxu0 0
    %672 = vmatprep.subr.bf16.mxu0 0
    %673 = vmatpush1.bf16.msra.mxu0 0
    %674 = vmatprep.subr.bf16.mxu0 0
    %675 = vmatpush1.bf16.msra.mxu0 0
    %676 = vmatprep.mubr.bf16.mxu0 0
    %677 = vmatmul.mubr.bf16.gmra.mrb[0].mxu0 %v639
    %v678 = vpop.f32.mrb[0].mxu0
    %v679 = vadd.f32 %v612, %v678
    %v680 = vpop.f32.mrb[0].mxu0
    %v681 = vpop.f32.mrb[0].mxu0
    %v682 = vadd.f32 %v615, %v681
    %v683 = vpop.f32.mrb[0].mxu0
    %684 = vmatprep.mubr.bf16.mxu0 0
    %685 = vmatmul.mubr.bf16.gmra.mrb[0].mxu0 %v642
    %v686 = vpop.f32.mrb[0].mxu0
    %v687 = vadd.f32 %v620, %v686
    %v688 = vpop.f32.mrb[0].mxu0
    %v689 = vpop.f32.mrb[0].mxu0
    %v690 = vadd.f32 %v623, %v689
    %v691 = vpop.f32.mrb[0].mxu0
    %692 = vdwg.mxu0
    %v693 = vmax.f32 %v679, 0.0
    %v694 = vmax.f32 %v682, 0.0
    %v695 = vmax.f32 %v687, 0.0
    %v696 = vmax.f32 %v690, 0.0
    %v697 = vld [vmem:[%s11] sm:$0xf]
    %v698 = vld [vmem:[%s11 + $0x4] sm:$0xf]
    %v699 = vld [vmem:[%s11 + $0x8] sm:$0xf]
    %v700 = vld [vmem:[%s11 + $0xc] sm:$0xf]
    %v701 = vpack.c.bf16 %v694, %v693
    %v702 = vpack.c.bf16 %v696, %v695
    %v703 = vld [vmem:[%s12] sm:$0xf]
    %v704 = vld [vmem:[%s12 + $0x4] sm:$0xf]
    %v705 = vld [vmem:[%s12 + $0x8] sm:$0xf]
    %v706 = vld [vmem:[%s12 + $0xc] sm:$0xf]
    %v711 = vunpack.c.l.b16 %v703
    %v712 = vunpack.c.l.b16 %v704
    %v713 = vunpack.c.l.b16 %v705
    %v714 = vunpack.c.l.b16 %v706
    %v715 = vpack.c.b16 %v712, %v711
    %v716 = vpack.c.b16 %v714, %v713
    %v720 = vsel %vm570, %v701, 0
    %v723 = vsel %vm570, %v702, 0
    %725 = vmatprep.subr.bf16.mxu0 0
    %726 = vmatpush1.bf16.msra.mxu0 %v715
    %727 = vmatprep.subr.bf16.mxu0 0
    %728 = vmatpush1.bf16.msra.mxu0 %v716
    %729 = vmatprep.subr.bf16.mxu0 0
    %730 = vmatpush1.bf16.msra.mxu0 0
    %731 = vmatprep.subr.bf16.mxu0 0
    %732 = vmatpush1.bf16.msra.mxu0 0
    %733 = vmatprep.subr.bf16.mxu0 0
    %734 = vmatpush1.bf16.msra.mxu0 0
    %735 = vmatprep.subr.bf16.mxu0 0
    %736 = vmatpush1.bf16.msra.mxu0 0
    %737 = vmatprep.subr.bf16.mxu0 0
    %738 = vmatpush1.bf16.msra.mxu0 0
    %739 = vmatprep.subr.bf16.mxu0 0
    %740 = vmatpush1.bf16.msra.mxu0 0
    %741 = vmatprep.subr.bf16.mxu0 0
    %742 = vmatpush1.bf16.msra.mxu0 0
    %743 = vmatprep.subr.bf16.mxu0 0
    %744 = vmatpush1.bf16.msra.mxu0 0
    %745 = vmatprep.subr.bf16.mxu0 0
    %746 = vmatpush1.bf16.msra.mxu0 0
    %747 = vmatprep.subr.bf16.mxu0 0
    %748 = vmatpush1.bf16.msra.mxu0 0
    %749 = vmatprep.subr.bf16.mxu0 0
    %750 = vmatpush1.bf16.msra.mxu0 0
    %751 = vmatprep.subr.bf16.mxu0 0
    %752 = vmatpush1.bf16.msra.mxu0 0
    %753 = vmatprep.subr.bf16.mxu0 0
    %754 = vmatpush1.bf16.msra.mxu0 0
    %755 = vmatprep.subr.bf16.mxu0 0
    %756 = vmatpush1.bf16.msra.mxu0 0
    %757 = vmatprep.mubr.bf16.mxu0 0
    %758 = vmatmul.mubr.bf16.gmra.mrb[0].mxu0 %v720
    %v759 = vpop.f32.mrb[0].mxu0
    %v760 = vadd.f32 0.0, %v759
    %v761 = vpop.f32.mrb[0].mxu0
    %v762 = vpop.f32.mrb[0].mxu0
    %v763 = vadd.f32 0.0, %v762
    %v764 = vpop.f32.mrb[0].mxu0
    %765 = vmatprep.mubr.bf16.mxu0 0
    %766 = vmatmul.mubr.bf16.gmra.mrb[0].mxu0 %v723
    %v767 = vpop.f32.mrb[0].mxu0
    %v768 = vadd.f32 0.0, %v767
    %v769 = vpop.f32.mrb[0].mxu0
    %v770 = vpop.f32.mrb[0].mxu0
    %v771 = vadd.f32 0.0, %v770
    %v772 = vpop.f32.mrb[0].mxu0
    %773 = vdwg.mxu0
    %v778 = vunpack.c.l.b16 %v697
    %v779 = vunpack.c.l.b16 %v698
    %v780 = vunpack.c.l.b16 %v699
    %v781 = vunpack.c.l.b16 %v700
    %v782 = vpack.c.b16 %v779, %v778
    %v783 = vpack.c.b16 %v781, %v780
    %v787 = vsel %vm570, %v460, 0
    %v790 = vsel %vm570, %v461, 0
    %792 = vmatprep.subr.bf16.mxu0 0
    %793 = vmatpush1.bf16.msra.mxu0 %v782
    %794 = vmatprep.subr.bf16.mxu0 0
    %795 = vmatpush1.bf16.msra.mxu0 %v783
    %796 = vmatprep.subr.bf16.mxu0 0
    %797 = vmatpush1.bf16.msra.mxu0 0
    %798 = vmatprep.subr.bf16.mxu0 0
    %799 = vmatpush1.bf16.msra.mxu0 0
    %800 = vmatprep.subr.bf16.mxu0 0
    %801 = vmatpush1.bf16.msra.mxu0 0
    %802 = vmatprep.subr.bf16.mxu0 0
    %803 = vmatpush1.bf16.msra.mxu0 0
    %804 = vmatprep.subr.bf16.mxu0 0
    %805 = vmatpush1.bf16.msra.mxu0 0
    %806 = vmatprep.subr.bf16.mxu0 0
    %807 = vmatpush1.bf16.msra.mxu0 0
    %808 = vmatprep.subr.bf16.mxu0 0
    %809 = vmatpush1.bf16.msra.mxu0 0
    %810 = vmatprep.subr.bf16.mxu0 0
    %811 = vmatpush1.bf16.msra.mxu0 0
    %812 = vmatprep.subr.bf16.mxu0 0
    %813 = vmatpush1.bf16.msra.mxu0 0
    %814 = vmatprep.subr.bf16.mxu0 0
    %815 = vmatpush1.bf16.msra.mxu0 0
    %816 = vmatprep.subr.bf16.mxu0 0
    %817 = vmatpush1.bf16.msra.mxu0 0
    %818 = vmatprep.subr.bf16.mxu0 0
    %819 = vmatpush1.bf16.msra.mxu0 0
    %820 = vmatprep.subr.bf16.mxu0 0
    %821 = vmatpush1.bf16.msra.mxu0 0
    %822 = vmatprep.subr.bf16.mxu0 0
    %823 = vmatpush1.bf16.msra.mxu0 0
    %824 = vmatprep.mubr.bf16.mxu0 0
    %825 = vmatmul.mubr.bf16.gmra.mrb[0].mxu0 %v787
    %v826 = vpop.f32.mrb[0].mxu0
    %v827 = vadd.f32 %v760, %v826
    %v828 = vpop.f32.mrb[0].mxu0
    %v829 = vpop.f32.mrb[0].mxu0
    %v830 = vadd.f32 %v763, %v829
    %v831 = vpop.f32.mrb[0].mxu0
    %832 = vmatprep.mubr.bf16.mxu0 0
    %833 = vmatmul.mubr.bf16.gmra.mrb[0].mxu0 %v790
    %v834 = vpop.f32.mrb[0].mxu0
    %v835 = vadd.f32 %v768, %v834
    %v836 = vpop.f32.mrb[0].mxu0
    %v837 = vpop.f32.mrb[0].mxu0
    %v838 = vadd.f32 %v771, %v837
    %v839 = vpop.f32.mrb[0].mxu0
    %840 = vdwg.mxu0
    %v841 = vmax.f32 %v827, 0.0
    %v842 = vmax.f32 %v830, 0.0
    %v843 = vmax.f32 %v835, 0.0
    %v844 = vmax.f32 %v838, 0.0
    %v845 = vpack.c.bf16 %v842, %v841
    %v846 = vpack.c.bf16 %v844, %v843
    %847 = vmatprep.subr.bf16.mxu0 0
    %848 = vmatpush1.bf16.msra.mxu0 %v845
    %849 = vmatprep.subr.bf16.mxu0 0
    %850 = vmatpush1.bf16.msra.mxu0 0
    %851 = vmatprep.subr.bf16.mxu0 0
    %852 = vmatpush1.bf16.msra.mxu0 0
    %853 = vmatprep.subr.bf16.mxu0 0
    %854 = vmatpush1.bf16.msra.mxu0 0
    %855 = vmatprep.subr.bf16.mxu0 0
    %856 = vmatpush1.bf16.msra.mxu0 0
    %857 = vmatprep.subr.bf16.mxu0 0
    %858 = vmatpush1.bf16.msra.mxu0 0
    %859 = vmatprep.subr.bf16.mxu0 0
    %860 = vmatpush1.bf16.msra.mxu0 0
    %861 = vmatprep.subr.bf16.mxu0 0
    %862 = vmatpush1.bf16.msra.mxu0 0
    %863 = vmatprep.subr.bf16.mxu0 0
    %864 = vmatpush1.bf16.msra.mxu0 0
    %865 = vmatprep.subr.bf16.mxu0 0
    %866 = vmatpush1.bf16.msra.mxu0 0
    %867 = vmatprep.subr.bf16.mxu0 0
    %868 = vmatpush1.bf16.msra.mxu0 0
    %869 = vmatprep.subr.bf16.mxu0 0
    %870 = vmatpush1.bf16.msra.mxu0 0
    %871 = vmatprep.subr.bf16.mxu0 0
    %872 = vmatpush1.bf16.msra.mxu0 0
    %873 = vmatprep.subr.bf16.mxu0 0
    %874 = vmatpush1.bf16.msra.mxu0 0
    %875 = vmatprep.subr.bf16.mxu0 0
    %876 = vmatpush1.bf16.msra.mxu0 0
    %877 = vmatprep.subr.bf16.mxu0 0
    %878 = vmatpush1.bf16.msra.mxu0 0
    %879 = vmatprep.mubr.bf16.mxu0 0
    %880 = vmatmul.mubr.bf16.gmra.mrb[0].mxu0 %v227
    %v881 = vpop.f32.mrb[0].mxu0
    %v882 = vadd.f32 0.0, %v881
    %v883 = vpop.f32.mrb[0].mxu0
    %v884 = vpop.f32.mrb[0].mxu0
    %v885 = vadd.f32 0.0, %v884
    %v886 = vpop.f32.mrb[0].mxu0
    %887 = vdwg.mxu0
    %888 = vmatprep.subr.bf16.mxu0 0
    %889 = vmatpush1.bf16.msra.mxu0 %v846
    %890 = vmatprep.subr.bf16.mxu0 0
    %891 = vmatpush1.bf16.msra.mxu0 0
    %892 = vmatprep.subr.bf16.mxu0 0
    %893 = vmatpush1.bf16.msra.mxu0 0
    %894 = vmatprep.subr.bf16.mxu0 0
    %895 = vmatpush1.bf16.msra.mxu0 0
    %896 = vmatprep.subr.bf16.mxu0 0
    %897 = vmatpush1.bf16.msra.mxu0 0
    %898 = vmatprep.subr.bf16.mxu0 0
    %899 = vmatpush1.bf16.msra.mxu0 0
    %900 = vmatprep.subr.bf16.mxu0 0
    %901 = vmatpush1.bf16.msra.mxu0 0
    %902 = vmatprep.subr.bf16.mxu0 0
    %903 = vmatpush1.bf16.msra.mxu0 0
    %904 = vmatprep.subr.bf16.mxu0 0
    %905 = vmatpush1.bf16.msra.mxu0 0
    %906 = vmatprep.subr.bf16.mxu0 0
    %907 = vmatpush1.bf16.msra.mxu0 0
    %908 = vmatprep.subr.bf16.mxu0 0
    %909 = vmatpush1.bf16.msra.mxu0 0
    %910 = vmatprep.subr.bf16.mxu0 0
    %911 = vmatpush1.bf16.msra.mxu0 0
    %912 = vmatprep.subr.bf16.mxu0 0
    %913 = vmatpush1.bf16.msra.mxu0 0
    %914 = vmatprep.subr.bf16.mxu0 0
    %915 = vmatpush1.bf16.msra.mxu0 0
    %916 = vmatprep.subr.bf16.mxu0 0
    %917 = vmatpush1.bf16.msra.mxu0 0
    %918 = vmatprep.subr.bf16.mxu0 0
    %919 = vmatpush1.bf16.msra.mxu0 0
    %920 = vmatprep.mubr.bf16.mxu0 0
    %921 = vmatmul.mubr.bf16.gmra.mrb[0].mxu0 %v276
    %v922 = vpop.f32.mrb[0].mxu0
    %v923 = vadd.f32 0.0, %v922
    %v924 = vpop.f32.mrb[0].mxu0
    %v925 = vpop.f32.mrb[0].mxu0
    %v926 = vadd.f32 0.0, %v925
    %v927 = vpop.f32.mrb[0].mxu0
    %928 = vdwg.mxu0
    %v929 = vmul.f32 %v882, %v322
    %v930 = vmul.f32 %v885, %v327
    %v931 = vmul.f32 %v923, %v332
    %v932 = vmul.f32 %v926, %v337
    %v933 = vpack.c.bf16 %v930, %v929
    %v934 = vpack.c.bf16 %v932, %v931
    %s935 = scalar_lea.vmem %s9, 16
    %v936 = vld [vmem:[%s935] sm:$0xf]
    %v937 = vld [vmem:[%s935 + $0x4] sm:$0xf]
    %v938 = vld [vmem:[%s935 + $0x8] sm:$0xf]
    %v939 = vld [vmem:[%s935 + $0xc] sm:$0xf]
    %s940 = scalar_lea.vmem %s10, 16
    %v941 = vld [vmem:[%s940] sm:$0xf]
    %v942 = vld [vmem:[%s940 + $0x4] sm:$0xf]
    %v943 = vld [vmem:[%s940 + $0x8] sm:$0xf]
    %v944 = vld [vmem:[%s940 + $0xc] sm:$0xf]
    %v949 = vunpack.c.l.b16 %v941
    %v950 = vunpack.c.l.b16 %v942
    %v951 = vunpack.c.l.b16 %v943
    %v952 = vunpack.c.l.b16 %v944
    %v953 = vpack.c.b16 %v950, %v949
    %v954 = vpack.c.b16 %v952, %v951
    %957 = vmatprep.subr.bf16.mxu0 0
    %958 = vmatpush1.bf16.msra.mxu0 %v953
    %959 = vmatprep.subr.bf16.mxu0 0
    %960 = vmatpush1.bf16.msra.mxu0 %v954
    %961 = vmatprep.subr.bf16.mxu0 0
    %962 = vmatpush1.bf16.msra.mxu0 0
    %963 = vmatprep.subr.bf16.mxu0 0
    %964 = vmatpush1.bf16.msra.mxu0 0
    %965 = vmatprep.subr.bf16.mxu0 0
    %966 = vmatpush1.bf16.msra.mxu0 0
    %967 = vmatprep.subr.bf16.mxu0 0
    %968 = vmatpush1.bf16.msra.mxu0 0
    %969 = vmatprep.subr.bf16.mxu0 0
    %970 = vmatpush1.bf16.msra.mxu0 0
    %971 = vmatprep.subr.bf16.mxu0 0
    %972 = vmatpush1.bf16.msra.mxu0 0
    %973 = vmatprep.subr.bf16.mxu0 0
    %974 = vmatpush1.bf16.msra.mxu0 0
    %975 = vmatprep.subr.bf16.mxu0 0
    %976 = vmatpush1.bf16.msra.mxu0 0
    %977 = vmatprep.subr.bf16.mxu0 0
    %978 = vmatpush1.bf16.msra.mxu0 0
    %979 = vmatprep.subr.bf16.mxu0 0
    %980 = vmatpush1.bf16.msra.mxu0 0
    %981 = vmatprep.subr.bf16.mxu0 0
    %982 = vmatpush1.bf16.msra.mxu0 0
    %983 = vmatprep.subr.bf16.mxu0 0
    %984 = vmatpush1.bf16.msra.mxu0 0
    %985 = vmatprep.subr.bf16.mxu0 0
    %986 = vmatpush1.bf16.msra.mxu0 0
    %987 = vmatprep.subr.bf16.mxu0 0
    %988 = vmatpush1.bf16.msra.mxu0 0
    %989 = vmatprep.mubr.bf16.mxu0 0
    %990 = vmatmul.mubr.bf16.gmra.mrb[0].mxu0 %v572
    %v991 = vpop.f32.mrb[0].mxu0
    %v992 = vadd.f32 0.0, %v991
    %v993 = vpop.f32.mrb[0].mxu0
    %v994 = vpop.f32.mrb[0].mxu0
    %v995 = vadd.f32 0.0, %v994
    %v996 = vpop.f32.mrb[0].mxu0
    %997 = vmatprep.mubr.bf16.mxu0 0
    %998 = vmatmul.mubr.bf16.gmra.mrb[0].mxu0 %v575
    %v999 = vpop.f32.mrb[0].mxu0
    %v1000 = vadd.f32 0.0, %v999
    %v1001 = vpop.f32.mrb[0].mxu0
    %v1002 = vpop.f32.mrb[0].mxu0
    %v1003 = vadd.f32 0.0, %v1002
    %v1004 = vpop.f32.mrb[0].mxu0
    %1005 = vdwg.mxu0
    %v1010 = vunpack.c.l.b16 %v936
    %v1011 = vunpack.c.l.b16 %v937
    %v1012 = vunpack.c.l.b16 %v938
    %v1013 = vunpack.c.l.b16 %v939
    %v1014 = vpack.c.b16 %v1011, %v1010
    %v1015 = vpack.c.b16 %v1013, %v1012
    %v1019 = vsel %vm570, %v933, 0
    %v1022 = vsel %vm570, %v934, 0
    %1024 = vmatprep.subr.bf16.mxu0 0
    %1025 = vmatpush1.bf16.msra.mxu0 %v1014
    %1026 = vmatprep.subr.bf16.mxu0 0
    %1027 = vmatpush1.bf16.msra.mxu0 %v1015
    %1028 = vmatprep.subr.bf16.mxu0 0
    %1029 = vmatpush1.bf16.msra.mxu0 0
    %1030 = vmatprep.subr.bf16.mxu0 0
    %1031 = vmatpush1.bf16.msra.mxu0 0
    %1032 = vmatprep.subr.bf16.mxu0 0
    %1033 = vmatpush1.bf16.msra.mxu0 0
    %1034 = vmatprep.subr.bf16.mxu0 0
    %1035 = vmatpush1.bf16.msra.mxu0 0
    %1036 = vmatprep.subr.bf16.mxu0 0
    %1037 = vmatpush1.bf16.msra.mxu0 0
    %1038 = vmatprep.subr.bf16.mxu0 0
    %1039 = vmatpush1.bf16.msra.mxu0 0
    %1040 = vmatprep.subr.bf16.mxu0 0
    %1041 = vmatpush1.bf16.msra.mxu0 0
    %1042 = vmatprep.subr.bf16.mxu0 0
    %1043 = vmatpush1.bf16.msra.mxu0 0
    %1044 = vmatprep.subr.bf16.mxu0 0
    %1045 = vmatpush1.bf16.msra.mxu0 0
    %1046 = vmatprep.subr.bf16.mxu0 0
    %1047 = vmatpush1.bf16.msra.mxu0 0
    %1048 = vmatprep.subr.bf16.mxu0 0
    %1049 = vmatpush1.bf16.msra.mxu0 0
    %1050 = vmatprep.subr.bf16.mxu0 0
    %1051 = vmatpush1.bf16.msra.mxu0 0
    %1052 = vmatprep.subr.bf16.mxu0 0
    %1053 = vmatpush1.bf16.msra.mxu0 0
    %1054 = vmatprep.subr.bf16.mxu0 0
    %1055 = vmatpush1.bf16.msra.mxu0 0
    %1056 = vmatprep.mubr.bf16.mxu0 0
    %1057 = vmatmul.mubr.bf16.gmra.mrb[0].mxu0 %v1019
    %v1058 = vpop.f32.mrb[0].mxu0
    %v1059 = vadd.f32 %v992, %v1058
    %v1060 = vpop.f32.mrb[0].mxu0
    %v1061 = vpop.f32.mrb[0].mxu0
    %v1062 = vadd.f32 %v995, %v1061
    %v1063 = vpop.f32.mrb[0].mxu0
    %1064 = vmatprep.mubr.bf16.mxu0 0
    %1065 = vmatmul.mubr.bf16.gmra.mrb[0].mxu0 %v1022
    %v1066 = vpop.f32.mrb[0].mxu0
    %v1067 = vadd.f32 %v1000, %v1066
    %v1068 = vpop.f32.mrb[0].mxu0
    %v1069 = vpop.f32.mrb[0].mxu0
    %v1070 = vadd.f32 %v1003, %v1069
    %v1071 = vpop.f32.mrb[0].mxu0
    %1072 = vdwg.mxu0
    %v1073 = vmax.f32 %v1059, 0.0
    %v1074 = vmax.f32 %v1062, 0.0
    %v1075 = vmax.f32 %v1067, 0.0
    %v1076 = vmax.f32 %v1070, 0.0
    %s1077 = scalar_lea.vmem %s11, 16
    %v1078 = vld [vmem:[%s1077] sm:$0xf]
    %v1079 = vld [vmem:[%s1077 + $0x4] sm:$0xf]
    %v1080 = vld [vmem:[%s1077 + $0x8] sm:$0xf]
    %v1081 = vld [vmem:[%s1077 + $0xc] sm:$0xf]
    %v1082 = vpack.c.bf16 %v1074, %v1073
    %v1083 = vpack.c.bf16 %v1076, %v1075
    %s1084 = scalar_lea.vmem %s12, 16
    %v1085 = vld [vmem:[%s1084] sm:$0xf]
    %v1086 = vld [vmem:[%s1084 + $0x4] sm:$0xf]
    %v1087 = vld [vmem:[%s1084 + $0x8] sm:$0xf]
    %v1088 = vld [vmem:[%s1084 + $0xc] sm:$0xf]
    %v1093 = vunpack.c.l.b16 %v1085
    %v1094 = vunpack.c.l.b16 %v1086
    %v1095 = vunpack.c.l.b16 %v1087
    %v1096 = vunpack.c.l.b16 %v1088
    %v1097 = vpack.c.b16 %v1094, %v1093
    %v1098 = vpack.c.b16 %v1096, %v1095
    %v1102 = vsel %vm570, %v1082, 0
    %v1105 = vsel %vm570, %v1083, 0
    %1107 = vmatprep.subr.bf16.mxu0 0
    %1108 = vmatpush1.bf16.msra.mxu0 %v1097
    %1109 = vmatprep.subr.bf16.mxu0 0
    %1110 = vmatpush1.bf16.msra.mxu0 %v1098
    %1111 = vmatprep.subr.bf16.mxu0 0
    %1112 = vmatpush1.bf16.msra.mxu0 0
    %1113 = vmatprep.subr.bf16.mxu0 0
    %1114 = vmatpush1.bf16.msra.mxu0 0
    %1115 = vmatprep.subr.bf16.mxu0 0
    %1116 = vmatpush1.bf16.msra.mxu0 0
    %1117 = vmatprep.subr.bf16.mxu0 0
    %1118 = vmatpush1.bf16.msra.mxu0 0
    %1119 = vmatprep.subr.bf16.mxu0 0
    %1120 = vmatpush1.bf16.msra.mxu0 0
    %1121 = vmatprep.subr.bf16.mxu0 0
    %1122 = vmatpush1.bf16.msra.mxu0 0
    %1123 = vmatprep.subr.bf16.mxu0 0
    %1124 = vmatpush1.bf16.msra.mxu0 0
    %1125 = vmatprep.subr.bf16.mxu0 0
    %1126 = vmatpush1.bf16.msra.mxu0 0
    %1127 = vmatprep.subr.bf16.mxu0 0
    %1128 = vmatpush1.bf16.msra.mxu0 0
    %1129 = vmatprep.subr.bf16.mxu0 0
    %1130 = vmatpush1.bf16.msra.mxu0 0
    %1131 = vmatprep.subr.bf16.mxu0 0
    %1132 = vmatpush1.bf16.msra.mxu0 0
    %1133 = vmatprep.subr.bf16.mxu0 0
    %1134 = vmatpush1.bf16.msra.mxu0 0
    %1135 = vmatprep.subr.bf16.mxu0 0
    %1136 = vmatpush1.bf16.msra.mxu0 0
    %1137 = vmatprep.subr.bf16.mxu0 0
    %1138 = vmatpush1.bf16.msra.mxu0 0
    %1139 = vmatprep.mubr.bf16.mxu0 0
    %1140 = vmatmul.mubr.bf16.gmra.mrb[0].mxu0 %v1102
    %v1141 = vpop.f32.mrb[0].mxu0
    %v1142 = vadd.f32 0.0, %v1141
    %v1143 = vpop.f32.mrb[0].mxu0
    %v1144 = vpop.f32.mrb[0].mxu0
    %v1145 = vadd.f32 0.0, %v1144
    %v1146 = vpop.f32.mrb[0].mxu0
    %1147 = vmatprep.mubr.bf16.mxu0 0
    %1148 = vmatmul.mubr.bf16.gmra.mrb[0].mxu0 %v1105
    %v1149 = vpop.f32.mrb[0].mxu0
    %v1150 = vadd.f32 0.0, %v1149
    %v1151 = vpop.f32.mrb[0].mxu0
    %v1152 = vpop.f32.mrb[0].mxu0
    %v1153 = vadd.f32 0.0, %v1152
    %v1154 = vpop.f32.mrb[0].mxu0
    %1155 = vdwg.mxu0
    %v1160 = vunpack.c.l.b16 %v1078
    %v1161 = vunpack.c.l.b16 %v1079
    %v1162 = vunpack.c.l.b16 %v1080
    %v1163 = vunpack.c.l.b16 %v1081
    %v1164 = vpack.c.b16 %v1161, %v1160
    %v1165 = vpack.c.b16 %v1163, %v1162
    %v1169 = vsel %vm570, %v845, 0
    %v1172 = vsel %vm570, %v846, 0
    %1174 = vmatprep.subr.bf16.mxu0 0
    %1175 = vmatpush1.bf16.msra.mxu0 %v1164
    %1176 = vmatprep.subr.bf16.mxu0 0
    %1177 = vmatpush1.bf16.msra.mxu0 %v1165
    %1178 = vmatprep.subr.bf16.mxu0 0
    %1179 = vmatpush1.bf16.msra.mxu0 0
    %1180 = vmatprep.subr.bf16.mxu0 0
    %1181 = vmatpush1.bf16.msra.mxu0 0
    %1182 = vmatprep.subr.bf16.mxu0 0
    %1183 = vmatpush1.bf16.msra.mxu0 0
    %1184 = vmatprep.subr.bf16.mxu0 0
    %1185 = vmatpush1.bf16.msra.mxu0 0
    %1186 = vmatprep.subr.bf16.mxu0 0
    %1187 = vmatpush1.bf16.msra.mxu0 0
    %1188 = vmatprep.subr.bf16.mxu0 0
    %1189 = vmatpush1.bf16.msra.mxu0 0
    %1190 = vmatprep.subr.bf16.mxu0 0
    %1191 = vmatpush1.bf16.msra.mxu0 0
    %1192 = vmatprep.subr.bf16.mxu0 0
    %1193 = vmatpush1.bf16.msra.mxu0 0
    %1194 = vmatprep.subr.bf16.mxu0 0
    %1195 = vmatpush1.bf16.msra.mxu0 0
    %1196 = vmatprep.subr.bf16.mxu0 0
    %1197 = vmatpush1.bf16.msra.mxu0 0
    %1198 = vmatprep.subr.bf16.mxu0 0
    %1199 = vmatpush1.bf16.msra.mxu0 0
    %1200 = vmatprep.subr.bf16.mxu0 0
    %1201 = vmatpush1.bf16.msra.mxu0 0
    %1202 = vmatprep.subr.bf16.mxu0 0
    %1203 = vmatpush1.bf16.msra.mxu0 0
    %1204 = vmatprep.subr.bf16.mxu0 0
    %1205 = vmatpush1.bf16.msra.mxu0 0
    %1206 = vmatprep.mubr.bf16.mxu0 0
    %1207 = vmatmul.mubr.bf16.gmra.mrb[0].mxu0 %v1169
    %v1208 = vpop.f32.mrb[0].mxu0
    %v1209 = vadd.f32 %v1142, %v1208
    %v1210 = vpop.f32.mrb[0].mxu0
    %v1211 = vpop.f32.mrb[0].mxu0
    %v1212 = vadd.f32 %v1145, %v1211
    %v1213 = vpop.f32.mrb[0].mxu0
    %1214 = vmatprep.mubr.bf16.mxu0 0
    %1215 = vmatmul.mubr.bf16.gmra.mrb[0].mxu0 %v1172
    %v1216 = vpop.f32.mrb[0].mxu0
    %v1217 = vadd.f32 %v1150, %v1216
    %v1218 = vpop.f32.mrb[0].mxu0
    %v1219 = vpop.f32.mrb[0].mxu0
    %v1220 = vadd.f32 %v1153, %v1219
    %v1221 = vpop.f32.mrb[0].mxu0
    %1222 = vdwg.mxu0
    %v1223 = vmax.f32 %v1209, 0.0
    %v1224 = vmax.f32 %v1212, 0.0
    %v1225 = vmax.f32 %v1217, 0.0
    %v1226 = vmax.f32 %v1220, 0.0
    %v1227 = vpack.c.bf16 %v1224, %v1223
    %v1228 = vpack.c.bf16 %v1226, %v1225
    %1229 = vmatprep.subr.bf16.mxu0 0
    %1230 = vmatpush1.bf16.msra.mxu0 %v1227
    %1231 = vmatprep.subr.bf16.mxu0 0
    %1232 = vmatpush1.bf16.msra.mxu0 0
    %1233 = vmatprep.subr.bf16.mxu0 0
    %1234 = vmatpush1.bf16.msra.mxu0 0
    %1235 = vmatprep.subr.bf16.mxu0 0
    %1236 = vmatpush1.bf16.msra.mxu0 0
    %1237 = vmatprep.subr.bf16.mxu0 0
    %1238 = vmatpush1.bf16.msra.mxu0 0
    %1239 = vmatprep.subr.bf16.mxu0 0
    %1240 = vmatpush1.bf16.msra.mxu0 0
    %1241 = vmatprep.subr.bf16.mxu0 0
    %1242 = vmatpush1.bf16.msra.mxu0 0
    %1243 = vmatprep.subr.bf16.mxu0 0
    %1244 = vmatpush1.bf16.msra.mxu0 0
    %1245 = vmatprep.subr.bf16.mxu0 0
    %1246 = vmatpush1.bf16.msra.mxu0 0
    %1247 = vmatprep.subr.bf16.mxu0 0
    %1248 = vmatpush1.bf16.msra.mxu0 0
    %1249 = vmatprep.subr.bf16.mxu0 0
    %1250 = vmatpush1.bf16.msra.mxu0 0
    %1251 = vmatprep.subr.bf16.mxu0 0
    %1252 = vmatpush1.bf16.msra.mxu0 0
    %1253 = vmatprep.subr.bf16.mxu0 0
    %1254 = vmatpush1.bf16.msra.mxu0 0
    %1255 = vmatprep.subr.bf16.mxu0 0
    %1256 = vmatpush1.bf16.msra.mxu0 0
    %1257 = vmatprep.subr.bf16.mxu0 0
    %1258 = vmatpush1.bf16.msra.mxu0 0
    %1259 = vmatprep.subr.bf16.mxu0 0
    %1260 = vmatpush1.bf16.msra.mxu0 0
    %1261 = vmatprep.mubr.bf16.mxu0 0
    %1262 = vmatmul.mubr.bf16.gmra.mrb[0].mxu0 %v227
    %v1263 = vpop.f32.mrb[0].mxu0
    %v1264 = vadd.f32 0.0, %v1263
    %v1265 = vpop.f32.mrb[0].mxu0
    %v1266 = vpop.f32.mrb[0].mxu0
    %v1267 = vadd.f32 0.0, %v1266
    %v1268 = vpop.f32.mrb[0].mxu0
    %1269 = vdwg.mxu0
    %1270 = vmatprep.subr.bf16.mxu0 0
    %1271 = vmatpush1.bf16.msra.mxu0 %v1228
    %1272 = vmatprep.subr.bf16.mxu0 0
    %1273 = vmatpush1.bf16.msra.mxu0 0
    %1274 = vmatprep.subr.bf16.mxu0 0
    %1275 = vmatpush1.bf16.msra.mxu0 0
    %1276 = vmatprep.subr.bf16.mxu0 0
    %1277 = vmatpush1.bf16.msra.mxu0 0
    %1278 = vmatprep.subr.bf16.mxu0 0
    %1279 = vmatpush1.bf16.msra.mxu0 0
    %1280 = vmatprep.subr.bf16.mxu0 0
    %1281 = vmatpush1.bf16.msra.mxu0 0
    %1282 = vmatprep.subr.bf16.mxu0 0
    %1283 = vmatpush1.bf16.msra.mxu0 0
    %1284 = vmatprep.subr.bf16.mxu0 0
    %1285 = vmatpush1.bf16.msra.mxu0 0
    %1286 = vmatprep.subr.bf16.mxu0 0
    %1287 = vmatpush1.bf16.msra.mxu0 0
    %1288 = vmatprep.subr.bf16.mxu0 0
    %1289 = vmatpush1.bf16.msra.mxu0 0
    %1290 = vmatprep.subr.bf16.mxu0 0
    %1291 = vmatpush1.bf16.msra.mxu0 0
    %1292 = vmatprep.subr.bf16.mxu0 0
    %1293 = vmatpush1.bf16.msra.mxu0 0
    %1294 = vmatprep.subr.bf16.mxu0 0
    %1295 = vmatpush1.bf16.msra.mxu0 0
    %1296 = vmatprep.subr.bf16.mxu0 0
    %1297 = vmatpush1.bf16.msra.mxu0 0
    %1298 = vmatprep.subr.bf16.mxu0 0
    %1299 = vmatpush1.bf16.msra.mxu0 0
    %1300 = vmatprep.subr.bf16.mxu0 0
    %1301 = vmatpush1.bf16.msra.mxu0 0
    %1302 = vmatprep.mubr.bf16.mxu0 0
    %1303 = vmatmul.mubr.bf16.gmra.mrb[0].mxu0 %v276
    %v1304 = vpop.f32.mrb[0].mxu0
    %v1305 = vadd.f32 0.0, %v1304
    %v1306 = vpop.f32.mrb[0].mxu0
    %v1307 = vpop.f32.mrb[0].mxu0
    %v1308 = vadd.f32 0.0, %v1307
    %v1309 = vpop.f32.mrb[0].mxu0
    %1310 = vdwg.mxu0
    %v1311 = vmul.f32 %v1264, %v322
    %v1312 = vmul.f32 %v1267, %v327
    %v1313 = vmul.f32 %v1305, %v332
    %v1314 = vmul.f32 %v1308, %v337
    %v1315 = vpack.c.bf16 %v1312, %v1311
    %v1316 = vpack.c.bf16 %v1314, %v1313
    %s1317 = scalar_lea.vmem %s9, 32
    %v1318 = vld [vmem:[%s1317] sm:$0xf]
    %v1319 = vld [vmem:[%s1317 + $0x4] sm:$0xf]
    %v1320 = vld [vmem:[%s1317 + $0x8] sm:$0xf]
    %v1321 = vld [vmem:[%s1317 + $0xc] sm:$0xf]
    %s1322 = scalar_lea.vmem %s10, 32
    %v1323 = vld [vmem:[%s1322] sm:$0xf]
    %v1324 = vld [vmem:[%s1322 + $0x4] sm:$0xf]
    %v1325 = vld [vmem:[%s1322 + $0x8] sm:$0xf]
    %v1326 = vld [vmem:[%s1322 + $0xc] sm:$0xf]
    %v1331 = vunpack.c.l.b16 %v1323
    %v1332 = vunpack.c.l.b16 %v1324
    %v1333 = vunpack.c.l.b16 %v1325
    %v1334 = vunpack.c.l.b16 %v1326
    %v1335 = vpack.c.b16 %v1332, %v1331
    %v1336 = vpack.c.b16 %v1334, %v1333
    %1339 = vmatprep.subr.bf16.mxu0 0
    %1340 = vmatpush1.bf16.msra.mxu0 %v1335
    %1341 = vmatprep.subr.bf16.mxu0 0
    %1342 = vmatpush1.bf16.msra.mxu0 %v1336
    %1343 = vmatprep.subr.bf16.mxu0 0
    %1344 = vmatpush1.bf16.msra.mxu0 0
    %1345 = vmatprep.subr.bf16.mxu0 0
    %1346 = vmatpush1.bf16.msra.mxu0 0
    %1347 = vmatprep.subr.bf16.mxu0 0
    %1348 = vmatpush1.bf16.msra.mxu0 0
    %1349 = vmatprep.subr.bf16.mxu0 0
    %1350 = vmatpush1.bf16.msra.mxu0 0
    %1351 = vmatprep.subr.bf16.mxu0 0
    %1352 = vmatpush1.bf16.msra.mxu0 0
    %1353 = vmatprep.subr.bf16.mxu0 0
    %1354 = vmatpush1.bf16.msra.mxu0 0
    %1355 = vmatprep.subr.bf16.mxu0 0
    %1356 = vmatpush1.bf16.msra.mxu0 0
    %1357 = vmatprep.subr.bf16.mxu0 0
    %1358 = vmatpush1.bf16.msra.mxu0 0
    %1359 = vmatprep.subr.bf16.mxu0 0
    %1360 = vmatpush1.bf16.msra.mxu0 0
    %1361 = vmatprep.subr.bf16.mxu0 0
    %1362 = vmatpush1.bf16.msra.mxu0 0
    %1363 = vmatprep.subr.bf16.mxu0 0
    %1364 = vmatpush1.bf16.msra.mxu0 0
    %1365 = vmatprep.subr.bf16.mxu0 0
    %1366 = vmatpush1.bf16.msra.mxu0 0
    %1367 = vmatprep.subr.bf16.mxu0 0
    %1368 = vmatpush1.bf16.msra.mxu0 0
    %1369 = vmatprep.subr.bf16.mxu0 0
    %1370 = vmatpush1.bf16.msra.mxu0 0
    %1371 = vmatprep.mubr.bf16.mxu0 0
    %1372 = vmatmul.mubr.bf16.gmra.mrb[0].mxu0 %v572
    %v1373 = vpop.f32.mrb[0].mxu0
    %v1374 = vadd.f32 0.0, %v1373
    %v1375 = vpop.f32.mrb[0].mxu0
    %v1376 = vpop.f32.mrb[0].mxu0
    %v1377 = vadd.f32 0.0, %v1376
    %v1378 = vpop.f32.mrb[0].mxu0
    %1379 = vmatprep.mubr.bf16.mxu0 0
    %1380 = vmatmul.mubr.bf16.gmra.mrb[0].mxu0 %v575
    %v1381 = vpop.f32.mrb[0].mxu0
    %v1382 = vadd.f32 0.0, %v1381
    %v1383 = vpop.f32.mrb[0].mxu0
    %v1384 = vpop.f32.mrb[0].mxu0
    %v1385 = vadd.f32 0.0, %v1384
    %v1386 = vpop.f32.mrb[0].mxu0
    %1387 = vdwg.mxu0
    %v1392 = vunpack.c.l.b16 %v1318
    %v1393 = vunpack.c.l.b16 %v1319
    %v1394 = vunpack.c.l.b16 %v1320
    %v1395 = vunpack.c.l.b16 %v1321
    %v1396 = vpack.c.b16 %v1393, %v1392
    %v1397 = vpack.c.b16 %v1395, %v1394
    %v1401 = vsel %vm570, %v1315, 0
    %v1404 = vsel %vm570, %v1316, 0
    %1406 = vmatprep.subr.bf16.mxu0 0
    %1407 = vmatpush1.bf16.msra.mxu0 %v1396
    %1408 = vmatprep.subr.bf16.mxu0 0
    %1409 = vmatpush1.bf16.msra.mxu0 %v1397
    %1410 = vmatprep.subr.bf16.mxu0 0
    %1411 = vmatpush1.bf16.msra.mxu0 0
    %1412 = vmatprep.subr.bf16.mxu0 0
    %1413 = vmatpush1.bf16.msra.mxu0 0
    %1414 = vmatprep.subr.bf16.mxu0 0
    %1415 = vmatpush1.bf16.msra.mxu0 0
    %1416 = vmatprep.subr.bf16.mxu0 0
    %1417 = vmatpush1.bf16.msra.mxu0 0
    %1418 = vmatprep.subr.bf16.mxu0 0
    %1419 = vmatpush1.bf16.msra.mxu0 0
    %1420 = vmatprep.subr.bf16.mxu0 0
    %1421 = vmatpush1.bf16.msra.mxu0 0
    %1422 = vmatprep.subr.bf16.mxu0 0
    %1423 = vmatpush1.bf16.msra.mxu0 0
    %1424 = vmatprep.subr.bf16.mxu0 0
    %1425 = vmatpush1.bf16.msra.mxu0 0
    %1426 = vmatprep.subr.bf16.mxu0 0
    %1427 = vmatpush1.bf16.msra.mxu0 0
    %1428 = vmatprep.subr.bf16.mxu0 0
    %1429 = vmatpush1.bf16.msra.mxu0 0
    %1430 = vmatprep.subr.bf16.mxu0 0
    %1431 = vmatpush1.bf16.msra.mxu0 0
    %1432 = vmatprep.subr.bf16.mxu0 0
    %1433 = vmatpush1.bf16.msra.mxu0 0
    %1434 = vmatprep.subr.bf16.mxu0 0
    %1435 = vmatpush1.bf16.msra.mxu0 0
    %1436 = vmatprep.subr.bf16.mxu0 0
    %1437 = vmatpush1.bf16.msra.mxu0 0
    %1438 = vmatprep.mubr.bf16.mxu0 0
    %1439 = vmatmul.mubr.bf16.gmra.mrb[0].mxu0 %v1401
    %v1440 = vpop.f32.mrb[0].mxu0
    %v1441 = vadd.f32 %v1374, %v1440
    %v1442 = vpop.f32.mrb[0].mxu0
    %v1443 = vpop.f32.mrb[0].mxu0
    %v1444 = vadd.f32 %v1377, %v1443
    %v1445 = vpop.f32.mrb[0].mxu0
    %1446 = vmatprep.mubr.bf16.mxu0 0
    %1447 = vmatmul.mubr.bf16.gmra.mrb[0].mxu0 %v1404
    %v1448 = vpop.f32.mrb[0].mxu0
    %v1449 = vadd.f32 %v1382, %v1448
    %v1450 = vpop.f32.mrb[0].mxu0
    %v1451 = vpop.f32.mrb[0].mxu0
    %v1452 = vadd.f32 %v1385, %v1451
    %v1453 = vpop.f32.mrb[0].mxu0
    %1454 = vdwg.mxu0
    %v1455 = vmax.f32 %v1441, 0.0
    %v1456 = vmax.f32 %v1444, 0.0
    %v1457 = vmax.f32 %v1449, 0.0
    %v1458 = vmax.f32 %v1452, 0.0
    %s1459 = scalar_lea.vmem %s11, 32
    %v1460 = vld [vmem:[%s1459] sm:$0xf]
    %v1461 = vld [vmem:[%s1459 + $0x4] sm:$0xf]
    %v1462 = vld [vmem:[%s1459 + $0x8] sm:$0xf]
    %v1463 = vld [vmem:[%s1459 + $0xc] sm:$0xf]
    %v1464 = vpack.c.bf16 %v1456, %v1455
    %v1465 = vpack.c.bf16 %v1458, %v1457
    %s1466 = scalar_lea.vmem %s12, 32
    %v1467 = vld [vmem:[%s1466] sm:$0xf]
    %v1468 = vld [vmem:[%s1466 + $0x4] sm:$0xf]
    %v1469 = vld [vmem:[%s1466 + $0x8] sm:$0xf]
    %v1470 = vld [vmem:[%s1466 + $0xc] sm:$0xf]
    %v1475 = vunpack.c.l.b16 %v1467
    %v1476 = vunpack.c.l.b16 %v1468
    %v1477 = vunpack.c.l.b16 %v1469
    %v1478 = vunpack.c.l.b16 %v1470
    %v1479 = vpack.c.b16 %v1476, %v1475
    %v1480 = vpack.c.b16 %v1478, %v1477
    %v1484 = vsel %vm570, %v1464, 0
    %v1487 = vsel %vm570, %v1465, 0
    %1489 = vmatprep.subr.bf16.mxu0 0
    %1490 = vmatpush1.bf16.msra.mxu0 %v1479
    %1491 = vmatprep.subr.bf16.mxu0 0
    %1492 = vmatpush1.bf16.msra.mxu0 %v1480
    %1493 = vmatprep.subr.bf16.mxu0 0
    %1494 = vmatpush1.bf16.msra.mxu0 0
    %1495 = vmatprep.subr.bf16.mxu0 0
    %1496 = vmatpush1.bf16.msra.mxu0 0
    %1497 = vmatprep.subr.bf16.mxu0 0
    %1498 = vmatpush1.bf16.msra.mxu0 0
    %1499 = vmatprep.subr.bf16.mxu0 0
    %1500 = vmatpush1.bf16.msra.mxu0 0
    %1501 = vmatprep.subr.bf16.mxu0 0
    %1502 = vmatpush1.bf16.msra.mxu0 0
    %1503 = vmatprep.subr.bf16.mxu0 0
    %1504 = vmatpush1.bf16.msra.mxu0 0
    %1505 = vmatprep.subr.bf16.mxu0 0
    %1506 = vmatpush1.bf16.msra.mxu0 0
    %1507 = vmatprep.subr.bf16.mxu0 0
    %1508 = vmatpush1.bf16.msra.mxu0 0
    %1509 = vmatprep.subr.bf16.mxu0 0
    %1510 = vmatpush1.bf16.msra.mxu0 0
    %1511 = vmatprep.subr.bf16.mxu0 0
    %1512 = vmatpush1.bf16.msra.mxu0 0
    %1513 = vmatprep.subr.bf16.mxu0 0
    %1514 = vmatpush1.bf16.msra.mxu0 0
    %1515 = vmatprep.subr.bf16.mxu0 0
    %1516 = vmatpush1.bf16.msra.mxu0 0
    %1517 = vmatprep.subr.bf16.mxu0 0
    %1518 = vmatpush1.bf16.msra.mxu0 0
    %1519 = vmatprep.subr.bf16.mxu0 0
    %1520 = vmatpush1.bf16.msra.mxu0 0
    %1521 = vmatprep.mubr.bf16.mxu0 0
    %1522 = vmatmul.mubr.bf16.gmra.mrb[0].mxu0 %v1484
    %v1523 = vpop.f32.mrb[0].mxu0
    %v1524 = vadd.f32 0.0, %v1523
    %v1525 = vpop.f32.mrb[0].mxu0
    %v1526 = vpop.f32.mrb[0].mxu0
    %v1527 = vadd.f32 0.0, %v1526
    %v1528 = vpop.f32.mrb[0].mxu0
    %1529 = vmatprep.mubr.bf16.mxu0 0
    %1530 = vmatmul.mubr.bf16.gmra.mrb[0].mxu0 %v1487
    %v1531 = vpop.f32.mrb[0].mxu0
    %v1532 = vadd.f32 0.0, %v1531
    %v1533 = vpop.f32.mrb[0].mxu0
    %v1534 = vpop.f32.mrb[0].mxu0
    %v1535 = vadd.f32 0.0, %v1534
    %v1536 = vpop.f32.mrb[0].mxu0
    %1537 = vdwg.mxu0
    %v1542 = vunpack.c.l.b16 %v1460
    %v1543 = vunpack.c.l.b16 %v1461
    %v1544 = vunpack.c.l.b16 %v1462
    %v1545 = vunpack.c.l.b16 %v1463
    %v1546 = vpack.c.b16 %v1543, %v1542
    %v1547 = vpack.c.b16 %v1545, %v1544
    %v1551 = vsel %vm570, %v1227, 0
    %v1554 = vsel %vm570, %v1228, 0
    %1556 = vmatprep.subr.bf16.mxu0 0
    %1557 = vmatpush1.bf16.msra.mxu0 %v1546
    %1558 = vmatprep.subr.bf16.mxu0 0
    %1559 = vmatpush1.bf16.msra.mxu0 %v1547
    %1560 = vmatprep.subr.bf16.mxu0 0
    %1561 = vmatpush1.bf16.msra.mxu0 0
    %1562 = vmatprep.subr.bf16.mxu0 0
    %1563 = vmatpush1.bf16.msra.mxu0 0
    %1564 = vmatprep.subr.bf16.mxu0 0
    %1565 = vmatpush1.bf16.msra.mxu0 0
    %1566 = vmatprep.subr.bf16.mxu0 0
    %1567 = vmatpush1.bf16.msra.mxu0 0
    %1568 = vmatprep.subr.bf16.mxu0 0
    %1569 = vmatpush1.bf16.msra.mxu0 0
    %1570 = vmatprep.subr.bf16.mxu0 0
    %1571 = vmatpush1.bf16.msra.mxu0 0
    %1572 = vmatprep.subr.bf16.mxu0 0
    %1573 = vmatpush1.bf16.msra.mxu0 0
    %1574 = vmatprep.subr.bf16.mxu0 0
    %1575 = vmatpush1.bf16.msra.mxu0 0
    %1576 = vmatprep.subr.bf16.mxu0 0
    %1577 = vmatpush1.bf16.msra.mxu0 0
    %1578 = vmatprep.subr.bf16.mxu0 0
    %1579 = vmatpush1.bf16.msra.mxu0 0
    %1580 = vmatprep.subr.bf16.mxu0 0
    %1581 = vmatpush1.bf16.msra.mxu0 0
    %1582 = vmatprep.subr.bf16.mxu0 0
    %1583 = vmatpush1.bf16.msra.mxu0 0
    %1584 = vmatprep.subr.bf16.mxu0 0
    %1585 = vmatpush1.bf16.msra.mxu0 0
    %1586 = vmatprep.subr.bf16.mxu0 0
    %1587 = vmatpush1.bf16.msra.mxu0 0
    %1588 = vmatprep.mubr.bf16.mxu0 0
    %1589 = vmatmul.mubr.bf16.gmra.mrb[0].mxu0 %v1551
    %v1590 = vpop.f32.mrb[0].mxu0
    %v1591 = vadd.f32 %v1524, %v1590
    %v1592 = vpop.f32.mrb[0].mxu0
    %v1593 = vpop.f32.mrb[0].mxu0
    %v1594 = vadd.f32 %v1527, %v1593
    %v1595 = vpop.f32.mrb[0].mxu0
    %1596 = vmatprep.mubr.bf16.mxu0 0
    %1597 = vmatmul.mubr.bf16.gmra.mrb[0].mxu0 %v1554
    %v1598 = vpop.f32.mrb[0].mxu0
    %v1599 = vadd.f32 %v1532, %v1598
    %v1600 = vpop.f32.mrb[0].mxu0
    %v1601 = vpop.f32.mrb[0].mxu0
    %v1602 = vadd.f32 %v1535, %v1601
    %v1603 = vpop.f32.mrb[0].mxu0
    %1604 = vdwg.mxu0
    %v1605 = vmax.f32 %v1591, 0.0
    %v1606 = vmax.f32 %v1594, 0.0
    %v1607 = vmax.f32 %v1599, 0.0
    %v1608 = vmax.f32 %v1602, 0.0
    %v1609 = vsel %vm570, %v1605, 0.0
    %v1610 = vsel %vm570, %v1606, 0.0
    %v1611 = vadd.f32 %v1609, %v1610
    %v1612 = vrot.slane %v1611, 4
    %v1613 = vadd.f32 %v1611, %v1612
    %v1614 = vrot.slane %v1613, 2
    %v1615 = vadd.f32 %v1613, %v1614
    %v1616 = vrot.slane %v1615, 1
    %v1617 = vadd.f32 %v1615, %v1616
    %v1618 = vsel %vm570, %v1607, 0.0
    %v1619 = vsel %vm570, %v1608, 0.0
    %v1620 = vadd.f32 %v1618, %v1619
    %v1621 = vrot.slane %v1620, 4
    %v1622 = vadd.f32 %v1620, %v1621
    %v1623 = vrot.slane %v1622, 2
    %v1624 = vadd.f32 %v1622, %v1623
    %v1625 = vrot.slane %v1624, 1
    %v1626 = vadd.f32 %v1624, %v1625
    %v1627 = vmul.f32 %v1617, 0.0625
    %v1628 = vmul.f32 %v1626, 0.0625
    %v1629 = vpack.c.bf16 %v1627, %v1627
    %v1630 = vpack.c.bf16 %v1628, %v1628
    %v1631 = vld [vmem:[%s13] sm:$0xf]
    %v1632 = vld [vmem:[%s13 + $0x4] sm:$0xf]
    %v1633 = vld [vmem:[%s13 + $0x8] sm:$0xf]
    %v1634 = vld [vmem:[%s13 + $0xc] sm:$0xf]
    %v1637 = vunpack.c.l.b16 %v1629
    %v1638 = vunpack.c.l.b16 %v1630
    %vm1639 = vcmask 1041409
    %v1640 = vsel %vm1639, %v1638, %v1637
    %v1641 = vpack.c.b16 %v1640, %v1640
    %v1646 = vunpack.c.l.b16 %v1631
    %v1647 = vunpack.c.l.b16 %v1632
    %v1648 = vunpack.c.l.b16 %v1633
    %v1649 = vunpack.c.l.b16 %v1634
    %v1650 = vpack.c.b16 %v1647, %v1646
    %v1651 = vpack.c.b16 %v1649, %v1648
    %v1655 = vsel %vm570, %v1641, 0
    %1657 = vmatprep.subr.bf16.mxu0 0
    %1658 = vmatpush1.bf16.msra.mxu0 %v1650
    %1659 = vmatprep.subr.bf16.mxu0 0
    %1660 = vmatpush1.bf16.msra.mxu0 %v1651
    %1661 = vmatprep.subr.bf16.mxu0 0
    %1662 = vmatpush1.bf16.msra.mxu0 0
    %1663 = vmatprep.subr.bf16.mxu0 0
    %1664 = vmatpush1.bf16.msra.mxu0 0
    %1665 = vmatprep.subr.bf16.mxu0 0
    %1666 = vmatpush1.bf16.msra.mxu0 0
    %1667 = vmatprep.subr.bf16.mxu0 0
    %1668 = vmatpush1.bf16.msra.mxu0 0
    %1669 = vmatprep.subr.bf16.mxu0 0
    %1670 = vmatpush1.bf16.msra.mxu0 0
    %1671 = vmatprep.subr.bf16.mxu0 0
    %1672 = vmatpush1.bf16.msra.mxu0 0
    %1673 = vmatprep.subr.bf16.mxu0 0
    %1674 = vmatpush1.bf16.msra.mxu0 0
    %1675 = vmatprep.subr.bf16.mxu0 0
    %1676 = vmatpush1.bf16.msra.mxu0 0
    %1677 = vmatprep.subr.bf16.mxu0 0
    %1678 = vmatpush1.bf16.msra.mxu0 0
    %1679 = vmatprep.subr.bf16.mxu0 0
    %1680 = vmatpush1.bf16.msra.mxu0 0
    %1681 = vmatprep.subr.bf16.mxu0 0
    %1682 = vmatpush1.bf16.msra.mxu0 0
    %1683 = vmatprep.subr.bf16.mxu0 0
    %1684 = vmatpush1.bf16.msra.mxu0 0
    %1685 = vmatprep.subr.bf16.mxu0 0
    %1686 = vmatpush1.bf16.msra.mxu0 0
    %1687 = vmatprep.subr.bf16.mxu0 0
    %1688 = vmatpush1.bf16.msra.mxu0 0
    %1689 = vmatprep.mubr.bf16.mxu0 0
    %1690 = vmatmul.mubr.bf16.gmra.mrb[0].mxu0 %v1655
    %v1691 = vpop.f32.mrb[0].mxu0
    %v1692 = vadd.f32 0.0, %v1691
    %v1693 = vpop.f32.mrb[0].mxu0
    %v1694 = vpop.f32.mrb[0].mxu0
    %v1695 = vpop.f32.mrb[0].mxu0
    %1696 = vdwg.mxu0
    %v1697 = vmax.f32 %v1692, 0.0
    %v1698 = vld [vmem:[%s14] sm:$0x1]
    %v1700 = vlaneseq
    %v1701 = vshrl.u32 %v1700, 7
    %v1702 = vsub.s32 0, %v1701
    %v1703 = vrot.slane %v1698, %v1702
    %v1705 = vmul.f32 %v1697, %v1703
    %vm1706 = vcmask 254976
    %v1707 = vsel %vm1706, %v1705, 0.0
    %1708 = vadd.xlane.f32.xlu0 %v1707
    %v1709 = vpop.xlane.xlu0 %1708
    %v1710 = vld [vmem:[%s15] sm:$0x1]
    %v1712 = vlaneseq
    %v1713 = vshrl.u32 %v1712, 7
    %v1714 = vsub.s32 0, %v1713
    %v1715 = vrot.slane %v1710, %v1714
    %v1717 = vmul.f32 %v1605, %v1715
    %v1718 = vmul.f32 %v1606, %v1715
    %v1719 = vmul.f32 %v1607, %v1715
    %v1720 = vmul.f32 %v1608, %v1715
    %v1721 = vsel %vm570, %v1717, 0.0
    %1722 = vadd.xlane.f32.xlu0 %v1721
    %v1723 = vpop.xlane.xlu0 %1722
    %v1724 = vsel %vm570, %v1718, 0.0
    %1725 = vadd.xlane.f32.xlu0 %v1724
    %v1726 = vpop.xlane.xlu0 %1725
    %v1727 = vsel %vm570, %v1719, 0.0
    %1728 = vadd.xlane.f32.xlu0 %v1727
    %v1729 = vpop.xlane.xlu0 %1728
    %v1730 = vsel %vm570, %v1720, 0.0
    %1731 = vadd.xlane.f32.xlu0 %v1730
    %v1732 = vpop.xlane.xlu0 %1731
    %v1737 = vlaneseq
    %v1738 = vand.u32 %v1737, 127
    %v1739 = vlaneseq
    %v1740 = vshrl.u32 %v1739, 7
    %v1741 = vsub.s32 %v1738, %v1740
    %v1742 = vrot.slane %v1723, %v1741
    %v1743 = vadd.s32 %v1738, 4294967288
    %v1744 = vlaneseq
    %v1745 = vshrl.u32 %v1744, 7
    %v1746 = vsub.s32 %v1743, %v1745
    %v1747 = vrot.slane %v1726, %v1746
    %vm1748 = vcmask 130112
    %v1749 = vsel %vm1748, %v1747, %v1742
    %v1750 = vlaneseq
    %v1751 = vshrl.u32 %v1750, 7
    %v1752 = vsub.s32 %v1738, %v1751
    %v1753 = vrot.slane %v1729, %v1752
    %v1754 = vlaneseq
    %v1755 = vshrl.u32 %v1754, 7
    %v1756 = vsub.s32 %v1743, %v1755
    %v1757 = vrot.slane %v1732, %v1756
    %v1758 = vsel %vm1748, %v1757, %v1753
    %v1759 = vsel %vm1639, %v1758, %v1749
    %v1761 = vadd.f32 %v1709, %v1759
    %v1762 = vld [vmem:[#allocation2] sm:$0x1]
    %v1764 = vlaneseq
    %v1765 = vshrl.u32 %v1764, 7
    %v1766 = vsub.s32 0, %v1765
    %v1767 = vrot.slane %v1762, %v1766
    %1768 = vset.pattern.permute.xlu0 0
    %1769 = vperm.xlu0 %1768, %v1767
    %v1770 = vpop.permute.xlu0 %1769
    %v1772 = vadd.f32 %v1761, %v1770
    %vm1773 = vcmask 123904
    %1774 = vst.msk [vmem:[#allocation3] sm:$0x3] %vm1773, %v1772
    // Predicated region
    $region70: #{mpnn_forward.1} parent=1 // pred_check
      _
    $region71: #{mpnn_forward.1} parent=1 // pred_check_branch
      %1776 = sbr.rel (0) target = $region73
    $region72: #{mpnn_forward.1} parent=1 // pred_region
      %s1778 = ssub.s32 32, 32
      %1779 = vsyncadd [#allocation4], %s1778
      %s1781 = sshll.u32 [#allocation3], 4
      %s1782 = int_to_ptr.vmem [resolvable:$true] %s1781
      %1784 = dma.vmem_to_hbm [thread:$0]  %s1782, 32, %s17, [#allocation4]
    $region73: #{mpnn_forward.1} parent=1 // pred_fallthru
      _
    // Predicated region
    $region74: #{mpnn_forward.1} parent=1 // pred_check
      _
    $region75: #{mpnn_forward.1} parent=1 // pred_check_branch
      %1786 = sbr.rel (0) target = $region77
    $region76: #{mpnn_forward.1} parent=1 // pred_region
      %1787 = dma.done [#allocation4], 32
    $region77: #{mpnn_forward.1} parent=1 // pred_fallthru
      _
    %1788 = vsyncpa [#allocation4], 1

</llo_original>
